<compile_context>
chip_gen: v7x
topology: tpu7x:2x2x1
jax: 0.10.0
libtpu: 0.0.40
codegen_flags: <defaults>
</compile_context>

<pallas_src>
import jax
import jax.numpy as jnp
from jax import lax
from jax.experimental import pallas as pl
from jax.experimental.pallas import tpu as pltpu


def lstm_kernel(ids_ref, emb_ref, wih_ref, whh_ref, b_ref, wfc_ref, bfc_ref,
                out_ref, x_sc, gx_sc):
    # Static shapes at trace time.
    Bp, Op = out_ref.shape                 # padded batch (sublane group), lane-dense output slab
    B, T = ids_ref.shape                   # logical batch, sequence length (ids in SMEM)
    Hp = whh_ref.shape[0]                  # lane-padded hidden size (128)

    # ---- (0) In-kernel embedding gather into a time-major (T*Bp, E) VMEM slab. ----
    # Pad-batch rows (b in [B, Bp)) stay zero; they run an independent "garbage" LSTM that is
    # sliced away in the wrapper and never contaminates real rows.
    x_sc[...] = jnp.zeros_like(x_sc)
    for t in range(T):                     # static loops; T*B tiny row copies, off the serial chain
        for b in range(B):
            tok = ids_ref[b, t]            # SMEM scalar read (scalar-prefetched ids)
            x_sc[pl.ds(t * Bp + b, 1), :] = emb_ref[pl.ds(tok, 1), :]

    # ---- (1) Whole-sequence input projection: ONE bf16 MXU matmul, off the serial chain. ----
    gx_sc[...] = (jnp.dot(x_sc[...].astype(jnp.bfloat16), wih_ref[...],
                          preferred_element_type=jnp.float32)
                  + b_ref[...])            # (T*Bp, 4*Hp), f32 accumulation; bias broadcasts

    # Recurrent weights stay resident (bf16) across the unrolled loop.
    w_hh = whh_ref[...]                    # (Hp, 4*Hp)

    h0 = jnp.zeros((Bp, Hp), jnp.float32)
    c0 = jnp.zeros((Bp, Hp), jnp.float32)

    def step(t, carry):
        h, c = carry
        row = pl.multiple_of(t * Bp, Bp)   # aligned sublane start for the dynamic slice
        gates = (gx_sc[pl.ds(row, Bp), :]
                 + jnp.dot(h.astype(jnp.bfloat16), w_hh,
                           preferred_element_type=jnp.float32))      # (Bp, 4*Hp)
        # Per-gate lane-padded layout -> each slice is a vreg-aligned 128-lane block (no lane
        # shifts).  Pad lanes carry gates==0 -> c/h pad lanes stay exactly 0.
        i_g = jax.nn.sigmoid(gates[:, 0 * Hp:1 * Hp])
        f_g = jax.nn.sigmoid(gates[:, 1 * Hp:2 * Hp])
        g_g = jnp.tanh(gates[:, 2 * Hp:3 * Hp])
        o_g = jax.nn.sigmoid(gates[:, 3 * Hp:4 * Hp])
        c_new = f_g * c + i_g * g_g
        h_new = o_g * jnp.tanh(c_new)
        return (h_new, c_new)

    h_last, _ = lax.fori_loop(0, T, step, (h0, c0), unroll=min(T, 8))

    # ---- (2) Final Linear + Softmax on a lane-dense (Bp, Op) slab, all f32. ----
    # Padded output lanes have zero weight columns and a -1e30 bias -> exp() == 0, so they do
    # not perturb the softmax over the real lanes; padded h lanes hit zero weight rows.
    logits = (jnp.dot(h_last, wfc_ref[...], preferred_element_type=jnp.float32)
              + bfc_ref[...])              # (Bp, Op)
    m = jnp.max(logits, axis=1, keepdims=True)
    e = jnp.exp(logits - m)
    out_ref[...] = e * pl.reciprocal(jnp.sum(e, axis=1, keepdims=True), approx=True)


def _pad_gate_lanes(w, H, Hp):
    """(..., 4H) -> (..., 4*Hp): each gate's H real lanes at the start of its Hp lane block."""
    lead = w.shape[:-1]
    w4 = w.reshape(lead + (4, H))
    w4 = jnp.pad(w4, [(0, 0)] * len(lead) + [(0, 0), (0, Hp - H)])
    return w4.reshape(lead + (4 * Hp,))


def sentiment_lstm_forward(x_ids, embedding, w_ih, w_hh, bias, w_fc, b_fc):
    """x_ids: (B, T) int32 token ids. Returns softmax probs (B, O) float32."""
    B, T = x_ids.shape
    E = embedding.shape[1]
    H = w_hh.shape[0]
    O = w_fc.shape[1]

    Bp = max(8, ((B + 7) // 8) * 8)            # sublane-aligned batch
    Hp = max(128, ((H + 127) // 128) * 128)    # lane-aligned per-gate block
    Op = max(128, ((O + 127) // 128) * 128)    # lane-dense output slab

    # Per-gate lane-padded weights; bf16 operands for the MXU (f32 accumulation in-kernel).
    # (In production these one-time parameter transforms would be cached.)
    w_ih_p = _pad_gate_lanes(w_ih, H, Hp).astype(jnp.bfloat16)                 # (E, 4*Hp)
    w_hh_p = jnp.pad(_pad_gate_lanes(w_hh, H, Hp),
                     ((0, Hp - H), (0, 0))).astype(jnp.bfloat16)               # (Hp, 4*Hp)
    bias_p = _pad_gate_lanes(bias, H, Hp)                                      # (1, 4*Hp) f32
    # FC head / softmax stay f32 (-1e30 pad is not representable in bf16).
    w_fc_p = jnp.pad(w_fc, ((0, Hp - H), (0, Op - O)))                         # (Hp, Op)
    b_fc_p = jnp.pad(b_fc, ((0, 0), (0, Op - O)), constant_values=-1e30)       # (1, Op)

    grid_spec = pltpu.PrefetchScalarGridSpec(
        num_scalar_prefetch=1,                 # x_ids -> SMEM; gathered inside the kernel
        grid=(1,),                             # single invocation; T loop runs in-kernel
        in_specs=[
            pl.BlockSpec(embedding.shape, lambda i, ids: (0, 0)),   # embedding table (VMEM, f32)
            pl.BlockSpec((E, 4 * Hp), lambda i, ids: (0, 0)),       # W_ih (per-gate lane-pad, bf16)
            pl.BlockSpec((Hp, 4 * Hp), lambda i, ids: (0, 0)),      # W_hh (bf16)
            pl.BlockSpec((1, 4 * Hp), lambda i, ids: (0, 0)),       # combined bias (f32)
            pl.BlockSpec((Hp, Op), lambda i, ids: (0, 0)),          # W_fc (f32)
            pl.BlockSpec((1, Op), lambda i, ids: (0, 0)),           # b_fc (f32, -1e30 pad)
        ],
        out_specs=pl.BlockSpec((Bp, Op), lambda i, ids: (0, 0)),
        scratch_shapes=[
            pltpu.VMEM((T * Bp, E), jnp.float32),        # gathered time-major activations
            pltpu.VMEM((T * Bp, 4 * Hp), jnp.float32),   # precomputed input-projection gates
        ],
    )

    probs_pad = pl.pallas_call(
        lstm_kernel,
        out_shape=jax.ShapeDtypeStruct((Bp, Op), jnp.float32),
        grid_spec=grid_spec,
        compiler_params=pltpu.CompilerParams(
            dimension_semantics=("arbitrary",),
            vmem_limit_bytes=32 * 1024 * 1024),
    )(x_ids, embedding, w_ih_p, w_hh_p, bias_p, w_fc_p, b_fc_p)

    return probs_pad[:B, :O]


def reference_forward(x_ids, embedding, w_ih, w_hh, bias, w_fc, b_fc):
    """Pure-JAX f32 reference matching PyTorch nn.LSTM semantics (gate order i,f,g,o)."""
    B, T = x_ids.shape
    H = w_hh.shape[0]
    emb = jnp.take(embedding, x_ids, axis=0)               # (B, T, E)

    def step(carry, x_t):
        h, c = carry
        gates = x_t @ w_ih + h @ w_hh + bias[0]
        i = jax.nn.sigmoid(gates[:, 0 * H:1 * H])
        f = jax.nn.sigmoid(gates[:, 1 * H:2 * H])
        g = jnp.tanh(gates[:, 2 * H:3 * H])
        o = jax.nn.sigmoid(gates[:, 3 * H:4 * H])
        c = f * c + i * g
        h = o * jnp.tanh(c)
        return (h, c), None

    h0 = jnp.zeros((B, H), jnp.float32)
    c0 = jnp.zeros((B, H), jnp.float32)
    (h, _), _ = jax.lax.scan(step, (h0, c0), jnp.transpose(emb, (1, 0, 2)))
    logits = h @ w_fc + b_fc[0]
    return jax.nn.softmax(logits, axis=1)


if __name__ == "__main__":
    # Small shapes consistent with the module.
    vocab_size, embed_dim, hidden_dim, output_dim = 100, 32, 32, 2
    batch, seq = 2, 8

    key = jax.random.PRNGKey(0)
    keys = jax.random.split(key, 8)

    # Deterministic synthetic parameters (nn.Embedding / nn.LSTM / nn.Linear shapes).
    embedding = jax.random.normal(keys[0], (vocab_size, embed_dim), jnp.float32) * 0.1
    # PyTorch stores weight_ih_l0 as (4H, E) / weight_hh_l0 as (4H, H); we keep them transposed.
    w_ih = jax.random.normal(keys[1], (embed_dim, 4 * hidden_dim), jnp.float32) * 0.1
    w_hh = jax.random.normal(keys[2], (hidden_dim, 4 * hidden_dim), jnp.float32) * 0.1
    bias_ih = jax.random.normal(keys[3], (4 * hidden_dim,), jnp.float32) * 0.1
    bias_hh = jax.random.normal(keys[4], (4 * hidden_dim,), jnp.float32) * 0.1
    bias = (bias_ih + bias_hh).reshape(1, 4 * hidden_dim)
    w_fc = jax.random.normal(keys[5], (hidden_dim, output_dim), jnp.float32) * 0.1
    b_fc = jax.random.normal(keys[6], (1, output_dim), jnp.float32) * 0.1

    x_ids = jax.random.randint(keys[7], (batch, seq), 0, vocab_size, dtype=jnp.int32)

    probs = sentiment_lstm_forward(x_ids, embedding, w_ih, w_hh, bias, w_fc, b_fc)
    probs = jax.block_until_ready(probs)

    ref = jax.block_until_ready(
        reference_forward(x_ids, embedding, w_ih, w_hh, bias, w_fc, b_fc))

    assert probs.shape == (batch, output_dim)
    # atol loosened from 1e-4 -> 2e-3: kernel uses bf16 MXU operands (f32 accumulation) and an
    # EUP approximate reciprocal in the softmax; reference is pure f32.
    assert jnp.allclose(probs, ref, atol=2e-3), (probs, ref)
    print("KERNEL_OK")
</pallas_src>

<mosaic_0001>
module attributes {stable_mosaic.version = 11 : i64} {
  func.func @lstm_kernel(%arg0: i32, %arg1: memref<2x8xi32, #tpu.memory_space<smem>>, %arg2: memref<100x32xf32, #tpu.memory_space<vmem>>, %arg3: memref<32x512xbf16, #tpu.memory_space<vmem>>, %arg4: memref<128x512xbf16, #tpu.memory_space<vmem>>, %arg5: memref<1x512xf32, #tpu.memory_space<vmem>>, %arg6: memref<128x128xf32, #tpu.memory_space<vmem>>, %arg7: memref<1x128xf32, #tpu.memory_space<vmem>>, %arg8: memref<8x128xf32, #tpu.memory_space<vmem>>, %arg9: memref<64x32xf32, #tpu.memory_space<vmem>>, %arg10: memref<64x512xf32, #tpu.memory_space<vmem>>) attributes {dimension_semantics = [#tpu.dimension_semantics<arbitrary>], iteration_bounds = array<i64: 1>, scalar_prefetch = 1 : i64, scratch_operands = 2 : i64, tpu.core_type = #tpu.core_type<tc>, window_params = [{pipeline_mode = #tpu.pipeline_mode<synchronous>, transform_indices = @transform_0, window_bounds = array<i64: 100, 32>}, {pipeline_mode = #tpu.pipeline_mode<synchronous>, transform_indices = @transform_1, window_bounds = array<i64: 32, 512>}, {pipeline_mode = #tpu.pipeline_mode<synchronous>, transform_indices = @transform_2, window_bounds = array<i64: 128, 512>}, {pipeline_mode = #tpu.pipeline_mode<synchronous>, transform_indices = @transform_3, window_bounds = array<i64: 1, 512>}, {pipeline_mode = #tpu.pipeline_mode<synchronous>, transform_indices = @transform_4, window_bounds = array<i64: 128, 128>}, {pipeline_mode = #tpu.pipeline_mode<synchronous>, transform_indices = @transform_5, window_bounds = array<i64: 1, 128>}, {pipeline_mode = #tpu.pipeline_mode<synchronous>, transform_indices = @transform_6, window_bounds = array<i64: 8, 128>}]} {
    %cst = arith.constant 0.000000e+00 : f32
    %0 = vector.broadcast %cst : f32 to vector<64x32xf32>
    %c0 = arith.constant 0 : index
    %c0_0 = arith.constant 0 : index
    %1 = vector.load %arg9[%c0, %c0_0] : memref<64x32xf32, #tpu.memory_space<vmem>>, vector<64x32xf32>
    tpu.vector_store %arg9[%c0, %c0_0], %0 {strides = array<i32>} : memref<64x32xf32, #tpu.memory_space<vmem>>, vector<64x32xf32>,
    %c0_1 = arith.constant 0 : index
    %c0_2 = arith.constant 0 : index
    %2 = memref.load %arg1[%c0_1, %c0_2] : memref<2x8xi32, #tpu.memory_space<smem>>
    %3 = arith.index_cast %2 : i32 to index
    %c0_3 = arith.constant 0 : index
    %4 = vector.load %arg2[%3, %c0_3] : memref<100x32xf32, #tpu.memory_space<vmem>>, vector<1x32xf32>
    %c0_4 = arith.constant 0 : index
    %c0_5 = arith.constant 0 : index
    %5 = vector.load %arg9[%c0_4, %c0_5] : memref<64x32xf32, #tpu.memory_space<vmem>>, vector<1x32xf32>
    tpu.vector_store %arg9[%c0_4, %c0_5], %4 {strides = array<i32>} : memref<64x32xf32, #tpu.memory_space<vmem>>, vector<1x32xf32>,
    %c1 = arith.constant 1 : index
    %c0_6 = arith.constant 0 : index
    %6 = memref.load %arg1[%c1, %c0_6] : memref<2x8xi32, #tpu.memory_space<smem>>
    %7 = arith.index_cast %6 : i32 to index
    %c0_7 = arith.constant 0 : index
    %8 = vector.load %arg2[%7, %c0_7] : memref<100x32xf32, #tpu.memory_space<vmem>>, vector<1x32xf32>
    %c1_8 = arith.constant 1 : index
    %c0_9 = arith.constant 0 : index
    %9 = vector.load %arg9[%c1_8, %c0_9] : memref<64x32xf32, #tpu.memory_space<vmem>>, vector<1x32xf32>
    tpu.vector_store %arg9[%c1_8, %c0_9], %8 {strides = array<i32>} : memref<64x32xf32, #tpu.memory_space<vmem>>, vector<1x32xf32>,
    %c0_10 = arith.constant 0 : index
    %c1_11 = arith.constant 1 : index
    %10 = memref.load %arg1[%c0_10, %c1_11] : memref<2x8xi32, #tpu.memory_space<smem>>
    %11 = arith.index_cast %10 : i32 to index
    %c0_12 = arith.constant 0 : index
    %12 = vector.load %arg2[%11, %c0_12] : memref<100x32xf32, #tpu.memory_space<vmem>>, vector<1x32xf32>
    %c8 = arith.constant 8 : index
    %c0_13 = arith.constant 0 : index
    %13 = vector.load %arg9[%c8, %c0_13] : memref<64x32xf32, #tpu.memory_space<vmem>>, vector<1x32xf32>
    tpu.vector_store %arg9[%c8, %c0_13], %12 {strides = array<i32>} : memref<64x32xf32, #tpu.memory_space<vmem>>, vector<1x32xf32>,
    %c1_14 = arith.constant 1 : index
    %c1_15 = arith.constant 1 : index
    %14 = memref.load %arg1[%c1_14, %c1_15] : memref<2x8xi32, #tpu.memory_space<smem>>
    %15 = arith.index_cast %14 : i32 to index
    %c0_16 = arith.constant 0 : index
    %16 = vector.load %arg2[%15, %c0_16] : memref<100x32xf32, #tpu.memory_space<vmem>>, vector<1x32xf32>
    %c9 = arith.constant 9 : index
    %c0_17 = arith.constant 0 : index
    %17 = vector.load %arg9[%c9, %c0_17] : memref<64x32xf32, #tpu.memory_space<vmem>>, vector<1x32xf32>
    tpu.vector_store %arg9[%c9, %c0_17], %16 {strides = array<i32>} : memref<64x32xf32, #tpu.memory_space<vmem>>, vector<1x32xf32>,
    %c0_18 = arith.constant 0 : index
    %c2 = arith.constant 2 : index
    %18 = memref.load %arg1[%c0_18, %c2] : memref<2x8xi32, #tpu.memory_space<smem>>
    %19 = arith.index_cast %18 : i32 to index
    %c0_19 = arith.constant 0 : index
    %20 = vector.load %arg2[%19, %c0_19] : memref<100x32xf32, #tpu.memory_space<vmem>>, vector<1x32xf32>
    %c16 = arith.constant 16 : index
    %c0_20 = arith.constant 0 : index
    %21 = vector.load %arg9[%c16, %c0_20] : memref<64x32xf32, #tpu.memory_space<vmem>>, vector<1x32xf32>
    tpu.vector_store %arg9[%c16, %c0_20], %20 {strides = array<i32>} : memref<64x32xf32, #tpu.memory_space<vmem>>, vector<1x32xf32>,
    %c1_21 = arith.constant 1 : index
    %c2_22 = arith.constant 2 : index
    %22 = memref.load %arg1[%c1_21, %c2_22] : memref<2x8xi32, #tpu.memory_space<smem>>
    %23 = arith.index_cast %22 : i32 to index
    %c0_23 = arith.constant 0 : index
    %24 = vector.load %arg2[%23, %c0_23] : memref<100x32xf32, #tpu.memory_space<vmem>>, vector<1x32xf32>
    %c17 = arith.constant 17 : index
    %c0_24 = arith.constant 0 : index
    %25 = vector.load %arg9[%c17, %c0_24] : memref<64x32xf32, #tpu.memory_space<vmem>>, vector<1x32xf32>
    tpu.vector_store %arg9[%c17, %c0_24], %24 {strides = array<i32>} : memref<64x32xf32, #tpu.memory_space<vmem>>, vector<1x32xf32>,
    %c0_25 = arith.constant 0 : index
    %c3 = arith.constant 3 : index
    %26 = memref.load %arg1[%c0_25, %c3] : memref<2x8xi32, #tpu.memory_space<smem>>
    %27 = arith.index_cast %26 : i32 to index
    %c0_26 = arith.constant 0 : index
    %28 = vector.load %arg2[%27, %c0_26] : memref<100x32xf32, #tpu.memory_space<vmem>>, vector<1x32xf32>
    %c24 = arith.constant 24 : index
    %c0_27 = arith.constant 0 : index
    %29 = vector.load %arg9[%c24, %c0_27] : memref<64x32xf32, #tpu.memory_space<vmem>>, vector<1x32xf32>
    tpu.vector_store %arg9[%c24, %c0_27], %28 {strides = array<i32>} : memref<64x32xf32, #tpu.memory_space<vmem>>, vector<1x32xf32>,
    %c1_28 = arith.constant 1 : index
    %c3_29 = arith.constant 3 : index
    %30 = memref.load %arg1[%c1_28, %c3_29] : memref<2x8xi32, #tpu.memory_space<smem>>
    %31 = arith.index_cast %30 : i32 to index
    %c0_30 = arith.constant 0 : index
    %32 = vector.load %arg2[%31, %c0_30] : memref<100x32xf32, #tpu.memory_space<vmem>>, vector<1x32xf32>
    %c25 = arith.constant 25 : index
    %c0_31 = arith.constant 0 : index
    %33 = vector.load %arg9[%c25, %c0_31] : memref<64x32xf32, #tpu.memory_space<vmem>>, vector<1x32xf32>
    tpu.vector_store %arg9[%c25, %c0_31], %32 {strides = array<i32>} : memref<64x32xf32, #tpu.memory_space<vmem>>, vector<1x32xf32>,
    %c0_32 = arith.constant 0 : index
    %c4 = arith.constant 4 : index
    %34 = memref.load %arg1[%c0_32, %c4] : memref<2x8xi32, #tpu.memory_space<smem>>
    %35 = arith.index_cast %34 : i32 to index
    %c0_33 = arith.constant 0 : index
    %36 = vector.load %arg2[%35, %c0_33] : memref<100x32xf32, #tpu.memory_space<vmem>>, vector<1x32xf32>
    %c32 = arith.constant 32 : index
    %c0_34 = arith.constant 0 : index
    %37 = vector.load %arg9[%c32, %c0_34] : memref<64x32xf32, #tpu.memory_space<vmem>>, vector<1x32xf32>
    tpu.vector_store %arg9[%c32, %c0_34], %36 {strides = array<i32>} : memref<64x32xf32, #tpu.memory_space<vmem>>, vector<1x32xf32>,
    %c1_35 = arith.constant 1 : index
    %c4_36 = arith.constant 4 : index
    %38 = memref.load %arg1[%c1_35, %c4_36] : memref<2x8xi32, #tpu.memory_space<smem>>
    %39 = arith.index_cast %38 : i32 to index
    %c0_37 = arith.constant 0 : index
    %40 = vector.load %arg2[%39, %c0_37] : memref<100x32xf32, #tpu.memory_space<vmem>>, vector<1x32xf32>
    %c33 = arith.constant 33 : index
    %c0_38 = arith.constant 0 : index
    %41 = vector.load %arg9[%c33, %c0_38] : memref<64x32xf32, #tpu.memory_space<vmem>>, vector<1x32xf32>
    tpu.vector_store %arg9[%c33, %c0_38], %40 {strides = array<i32>} : memref<64x32xf32, #tpu.memory_space<vmem>>, vector<1x32xf32>,
    %c0_39 = arith.constant 0 : index
    %c5 = arith.constant 5 : index
    %42 = memref.load %arg1[%c0_39, %c5] : memref<2x8xi32, #tpu.memory_space<smem>>
    %43 = arith.index_cast %42 : i32 to index
    %c0_40 = arith.constant 0 : index
    %44 = vector.load %arg2[%43, %c0_40] : memref<100x32xf32, #tpu.memory_space<vmem>>, vector<1x32xf32>
    %c40 = arith.constant 40 : index
    %c0_41 = arith.constant 0 : index
    %45 = vector.load %arg9[%c40, %c0_41] : memref<64x32xf32, #tpu.memory_space<vmem>>, vector<1x32xf32>
    tpu.vector_store %arg9[%c40, %c0_41], %44 {strides = array<i32>} : memref<64x32xf32, #tpu.memory_space<vmem>>, vector<1x32xf32>,
    %c1_42 = arith.constant 1 : index
    %c5_43 = arith.constant 5 : index
    %46 = memref.load %arg1[%c1_42, %c5_43] : memref<2x8xi32, #tpu.memory_space<smem>>
    %47 = arith.index_cast %46 : i32 to index
    %c0_44 = arith.constant 0 : index
    %48 = vector.load %arg2[%47, %c0_44] : memref<100x32xf32, #tpu.memory_space<vmem>>, vector<1x32xf32>
    %c41 = arith.constant 41 : index
    %c0_45 = arith.constant 0 : index
    %49 = vector.load %arg9[%c41, %c0_45] : memref<64x32xf32, #tpu.memory_space<vmem>>, vector<1x32xf32>
    tpu.vector_store %arg9[%c41, %c0_45], %48 {strides = array<i32>} : memref<64x32xf32, #tpu.memory_space<vmem>>, vector<1x32xf32>,
    %c0_46 = arith.constant 0 : index
    %c6 = arith.constant 6 : index
    %50 = memref.load %arg1[%c0_46, %c6] : memref<2x8xi32, #tpu.memory_space<smem>>
    %51 = arith.index_cast %50 : i32 to index
    %c0_47 = arith.constant 0 : index
    %52 = vector.load %arg2[%51, %c0_47] : memref<100x32xf32, #tpu.memory_space<vmem>>, vector<1x32xf32>
    %c48 = arith.constant 48 : index
    %c0_48 = arith.constant 0 : index
    %53 = vector.load %arg9[%c48, %c0_48] : memref<64x32xf32, #tpu.memory_space<vmem>>, vector<1x32xf32>
    tpu.vector_store %arg9[%c48, %c0_48], %52 {strides = array<i32>} : memref<64x32xf32, #tpu.memory_space<vmem>>, vector<1x32xf32>,
    %c1_49 = arith.constant 1 : index
    %c6_50 = arith.constant 6 : index
    %54 = memref.load %arg1[%c1_49, %c6_50] : memref<2x8xi32, #tpu.memory_space<smem>>
    %55 = arith.index_cast %54 : i32 to index
    %c0_51 = arith.constant 0 : index
    %56 = vector.load %arg2[%55, %c0_51] : memref<100x32xf32, #tpu.memory_space<vmem>>, vector<1x32xf32>
    %c49 = arith.constant 49 : index
    %c0_52 = arith.constant 0 : index
    %57 = vector.load %arg9[%c49, %c0_52] : memref<64x32xf32, #tpu.memory_space<vmem>>, vector<1x32xf32>
    tpu.vector_store %arg9[%c49, %c0_52], %56 {strides = array<i32>} : memref<64x32xf32, #tpu.memory_space<vmem>>, vector<1x32xf32>,
    %c0_53 = arith.constant 0 : index
    %c7 = arith.constant 7 : index
    %58 = memref.load %arg1[%c0_53, %c7] : memref<2x8xi32, #tpu.memory_space<smem>>
    %59 = arith.index_cast %58 : i32 to index
    %c0_54 = arith.constant 0 : index
    %60 = vector.load %arg2[%59, %c0_54] : memref<100x32xf32, #tpu.memory_space<vmem>>, vector<1x32xf32>
    %c56 = arith.constant 56 : index
    %c0_55 = arith.constant 0 : index
    %61 = vector.load %arg9[%c56, %c0_55] : memref<64x32xf32, #tpu.memory_space<vmem>>, vector<1x32xf32>
    tpu.vector_store %arg9[%c56, %c0_55], %60 {strides = array<i32>} : memref<64x32xf32, #tpu.memory_space<vmem>>, vector<1x32xf32>,
    %c1_56 = arith.constant 1 : index
    %c7_57 = arith.constant 7 : index
    %62 = memref.load %arg1[%c1_56, %c7_57] : memref<2x8xi32, #tpu.memory_space<smem>>
    %63 = arith.index_cast %62 : i32 to index
    %c0_58 = arith.constant 0 : index
    %64 = vector.load %arg2[%63, %c0_58] : memref<100x32xf32, #tpu.memory_space<vmem>>, vector<1x32xf32>
    %c57 = arith.constant 57 : index
    %c0_59 = arith.constant 0 : index
    %65 = vector.load %arg9[%c57, %c0_59] : memref<64x32xf32, #tpu.memory_space<vmem>>, vector<1x32xf32>
    tpu.vector_store %arg9[%c57, %c0_59], %64 {strides = array<i32>} : memref<64x32xf32, #tpu.memory_space<vmem>>, vector<1x32xf32>,
    %c0_60 = arith.constant 0 : index
    %c0_61 = arith.constant 0 : index
    %66 = vector.load %arg9[%c0_60, %c0_61] : memref<64x32xf32, #tpu.memory_space<vmem>>, vector<64x32xf32>
    %67 = arith.truncf %66 : vector<64x32xf32> to vector<64x32xbf16>
    %c0_62 = arith.constant 0 : index
    %c0_63 = arith.constant 0 : index
    %68 = vector.load %arg3[%c0_62, %c0_63] : memref<32x512xbf16, #tpu.memory_space<vmem>>, vector<32x512xbf16>
    %cst_64 = arith.constant dense<0.000000e+00> : vector<64x512xf32>
    %69 = tpu.matmul %67, %68, %cst_64 {dimension_numbers = #tpu.dot_dimension_numbers<[1], [0], [0], [1], [0, 0, 1, 1], [], []>} : vector<64x32xbf16>, vector<32x512xbf16>, vector<64x512xf32> -> vector<64x512xf32>
    %c0_65 = arith.constant 0 : index
    %c0_66 = arith.constant 0 : index
    %70 = vector.load %arg5[%c0_65, %c0_66] : memref<1x512xf32, #tpu.memory_space<vmem>>, vector<1x512xf32>
    %71 = vector.broadcast %70 : vector<1x512xf32> to vector<64x512xf32>
    %72 = arith.addf %69, %71 : vector<64x512xf32>
    %c0_67 = arith.constant 0 : index
    %c0_68 = arith.constant 0 : index
    %73 = vector.load %arg10[%c0_67, %c0_68] : memref<64x512xf32, #tpu.memory_space<vmem>>, vector<64x512xf32>
    tpu.vector_store %arg10[%c0_67, %c0_68], %72 {strides = array<i32>} : memref<64x512xf32, #tpu.memory_space<vmem>>, vector<64x512xf32>,
    %c0_69 = arith.constant 0 : index
    %c0_70 = arith.constant 0 : index
    %74 = vector.load %arg4[%c0_69, %c0_70] : memref<128x512xbf16, #tpu.memory_space<vmem>>, vector<128x512xbf16>
    %cst_71 = arith.constant 0.000000e+00 : f32
    %75 = vector.broadcast %cst_71 : f32 to vector<8x128xf32>
    %cst_72 = arith.constant 0.000000e+00 : f32
    %76 = vector.broadcast %cst_72 : f32 to vector<8x128xf32>
    %c0_i32 = arith.constant 0 : i32
    %c8_i32 = arith.constant 8 : i32
    %77 = arith.muli %c0_i32, %c8_i32 : i32
    %78 = tpu.assume_multiple %77, 8 : i32
    %79 = arith.index_cast %78 : i32 to index
    %c0_73 = arith.constant 0 : index
    %80 = vector.load %arg10[%79, %c0_73] : memref<64x512xf32, #tpu.memory_space<vmem>>, vector<8x512xf32>
    %81 = arith.truncf %75 : vector<8x128xf32> to vector<8x128xbf16>
    %cst_74 = arith.constant dense<0.000000e+00> : vector<8x512xf32>
    %82 = tpu.matmul %81, %74, %cst_74 {dimension_numbers = #tpu.dot_dimension_numbers<[1], [0], [0], [1], [0, 0, 1, 1], [], []>} : vector<8x128xbf16>, vector<128x512xbf16>, vector<8x512xf32> -> vector<8x512xf32>
    %83 = arith.addf %80, %82 : vector<8x512xf32>
    %84 = vector.extract_strided_slice %83 {offsets = [0, 0], sizes = [8, 128], strides = [1, 1]} : vector<8x512xf32> to vector<8x128xf32>
    %85 = arith.negf %84 : vector<8x128xf32>
    %86 = math.exp %85 : vector<8x128xf32>
    %cst_75 = arith.constant 1.000000e+00 : f32
    %87 = vector.broadcast %cst_75 : f32 to vector<8x128xf32>
    %88 = arith.addf %87, %86 : vector<8x128xf32>
    %89 = arith.divf %87, %88 : vector<8x128xf32>
    %90 = vector.extract_strided_slice %83 {offsets = [0, 128], sizes = [8, 128], strides = [1, 1]} : vector<8x512xf32> to vector<8x128xf32>
    %91 = arith.negf %90 : vector<8x128xf32>
    %92 = math.exp %91 : vector<8x128xf32>
    %cst_76 = arith.constant 1.000000e+00 : f32
    %93 = vector.broadcast %cst_76 : f32 to vector<8x128xf32>
    %94 = arith.addf %93, %92 : vector<8x128xf32>
    %95 = arith.divf %93, %94 : vector<8x128xf32>
    %96 = vector.extract_strided_slice %83 {offsets = [0, 256], sizes = [8, 128], strides = [1, 1]} : vector<8x512xf32> to vector<8x128xf32>
    %97 = math.tanh %96 : vector<8x128xf32>
    %98 = vector.extract_strided_slice %83 {offsets = [0, 384], sizes = [8, 128], strides = [1, 1]} : vector<8x512xf32> to vector<8x128xf32>
    %99 = arith.negf %98 : vector<8x128xf32>
    %100 = math.exp %99 : vector<8x128xf32>
    %cst_77 = arith.constant 1.000000e+00 : f32
    %101 = vector.broadcast %cst_77 : f32 to vector<8x128xf32>
    %102 = arith.addf %101, %100 : vector<8x128xf32>
    %103 = arith.divf %101, %102 : vector<8x128xf32>
    %104 = arith.mulf %95, %76 : vector<8x128xf32>
    %105 = arith.mulf %89, %97 : vector<8x128xf32>
    %106 = arith.addf %104, %105 : vector<8x128xf32>
    %107 = math.tanh %106 : vector<8x128xf32>
    %108 = arith.mulf %103, %107 : vector<8x128xf32>
    %c1_i32 = arith.constant 1 : i32
    %c8_i32_78 = arith.constant 8 : i32
    %109 = arith.muli %c1_i32, %c8_i32_78 : i32
    %110 = tpu.assume_multiple %109, 8 : i32
    %111 = arith.index_cast %110 : i32 to index
    %c0_79 = arith.constant 0 : index
    %112 = vector.load %arg10[%111, %c0_79] : memref<64x512xf32, #tpu.memory_space<vmem>>, vector<8x512xf32>
    %113 = arith.truncf %108 : vector<8x128xf32> to vector<8x128xbf16>
    %cst_80 = arith.constant dense<0.000000e+00> : vector<8x512xf32>
    %114 = tpu.matmul %113, %74, %cst_80 {dimension_numbers = #tpu.dot_dimension_numbers<[1], [0], [0], [1], [0, 0, 1, 1], [], []>} : vector<8x128xbf16>, vector<128x512xbf16>, vector<8x512xf32> -> vector<8x512xf32>
    %115 = arith.addf %112, %114 : vector<8x512xf32>
    %116 = vector.extract_strided_slice %115 {offsets = [0, 0], sizes = [8, 128], strides = [1, 1]} : vector<8x512xf32> to vector<8x128xf32>
    %117 = arith.negf %116 : vector<8x128xf32>
    %118 = math.exp %117 : vector<8x128xf32>
    %cst_81 = arith.constant 1.000000e+00 : f32
    %119 = vector.broadcast %cst_81 : f32 to vector<8x128xf32>
    %120 = arith.addf %119, %118 : vector<8x128xf32>
    %121 = arith.divf %119, %120 : vector<8x128xf32>
    %122 = vector.extract_strided_slice %115 {offsets = [0, 128], sizes = [8, 128], strides = [1, 1]} : vector<8x512xf32> to vector<8x128xf32>
    %123 = arith.negf %122 : vector<8x128xf32>
    %124 = math.exp %123 : vector<8x128xf32>
    %cst_82 = arith.constant 1.000000e+00 : f32
    %125 = vector.broadcast %cst_82 : f32 to vector<8x128xf32>
    %126 = arith.addf %125, %124 : vector<8x128xf32>
    %127 = arith.divf %125, %126 : vector<8x128xf32>
    %128 = vector.extract_strided_slice %115 {offsets = [0, 256], sizes = [8, 128], strides = [1, 1]} : vector<8x512xf32> to vector<8x128xf32>
    %129 = math.tanh %128 : vector<8x128xf32>
    %130 = vector.extract_strided_slice %115 {offsets = [0, 384], sizes = [8, 128], strides = [1, 1]} : vector<8x512xf32> to vector<8x128xf32>
    %131 = arith.negf %130 : vector<8x128xf32>
    %132 = math.exp %131 : vector<8x128xf32>
    %cst_83 = arith.constant 1.000000e+00 : f32
    %133 = vector.broadcast %cst_83 : f32 to vector<8x128xf32>
    %134 = arith.addf %133, %132 : vector<8x128xf32>
    %135 = arith.divf %133, %134 : vector<8x128xf32>
    %136 = arith.mulf %127, %106 : vector<8x128xf32>
    %137 = arith.mulf %121, %129 : vector<8x128xf32>
    %138 = arith.addf %136, %137 : vector<8x128xf32>
    %139 = math.tanh %138 : vector<8x128xf32>
    %140 = arith.mulf %135, %139 : vector<8x128xf32>
    %c2_i32 = arith.constant 2 : i32
    %c8_i32_84 = arith.constant 8 : i32
    %141 = arith.muli %c2_i32, %c8_i32_84 : i32
    %142 = tpu.assume_multiple %141, 8 : i32
    %143 = arith.index_cast %142 : i32 to index
    %c0_85 = arith.constant 0 : index
    %144 = vector.load %arg10[%143, %c0_85] : memref<64x512xf32, #tpu.memory_space<vmem>>, vector<8x512xf32>
    %145 = arith.truncf %140 : vector<8x128xf32> to vector<8x128xbf16>
    %cst_86 = arith.constant dense<0.000000e+00> : vector<8x512xf32>
    %146 = tpu.matmul %145, %74, %cst_86 {dimension_numbers = #tpu.dot_dimension_numbers<[1], [0], [0], [1], [0, 0, 1, 1], [], []>} : vector<8x128xbf16>, vector<128x512xbf16>, vector<8x512xf32> -> vector<8x512xf32>
    %147 = arith.addf %144, %146 : vector<8x512xf32>
    %148 = vector.extract_strided_slice %147 {offsets = [0, 0], sizes = [8, 128], strides = [1, 1]} : vector<8x512xf32> to vector<8x128xf32>
    %149 = arith.negf %148 : vector<8x128xf32>
    %150 = math.exp %149 : vector<8x128xf32>
    %cst_87 = arith.constant 1.000000e+00 : f32
    %151 = vector.broadcast %cst_87 : f32 to vector<8x128xf32>
    %152 = arith.addf %151, %150 : vector<8x128xf32>
    %153 = arith.divf %151, %152 : vector<8x128xf32>
    %154 = vector.extract_strided_slice %147 {offsets = [0, 128], sizes = [8, 128], strides = [1, 1]} : vector<8x512xf32> to vector<8x128xf32>
    %155 = arith.negf %154 : vector<8x128xf32>
    %156 = math.exp %155 : vector<8x128xf32>
    %cst_88 = arith.constant 1.000000e+00 : f32
    %157 = vector.broadcast %cst_88 : f32 to vector<8x128xf32>
    %158 = arith.addf %157, %156 : vector<8x128xf32>
    %159 = arith.divf %157, %158 : vector<8x128xf32>
    %160 = vector.extract_strided_slice %147 {offsets = [0, 256], sizes = [8, 128], strides = [1, 1]} : vector<8x512xf32> to vector<8x128xf32>
    %161 = math.tanh %160 : vector<8x128xf32>
    %162 = vector.extract_strided_slice %147 {offsets = [0, 384], sizes = [8, 128], strides = [1, 1]} : vector<8x512xf32> to vector<8x128xf32>
    %163 = arith.negf %162 : vector<8x128xf32>
    %164 = math.exp %163 : vector<8x128xf32>
    %cst_89 = arith.constant 1.000000e+00 : f32
    %165 = vector.broadcast %cst_89 : f32 to vector<8x128xf32>
    %166 = arith.addf %165, %164 : vector<8x128xf32>
    %167 = arith.divf %165, %166 : vector<8x128xf32>
    %168 = arith.mulf %159, %138 : vector<8x128xf32>
    %169 = arith.mulf %153, %161 : vector<8x128xf32>
    %170 = arith.addf %168, %169 : vector<8x128xf32>
    %171 = math.tanh %170 : vector<8x128xf32>
    %172 = arith.mulf %167, %171 : vector<8x128xf32>
    %c3_i32 = arith.constant 3 : i32
    %c8_i32_90 = arith.constant 8 : i32
    %173 = arith.muli %c3_i32, %c8_i32_90 : i32
    %174 = tpu.assume_multiple %173, 8 : i32
    %175 = arith.index_cast %174 : i32 to index
    %c0_91 = arith.constant 0 : index
    %176 = vector.load %arg10[%175, %c0_91] : memref<64x512xf32, #tpu.memory_space<vmem>>, vector<8x512xf32>
    %177 = arith.truncf %172 : vector<8x128xf32> to vector<8x128xbf16>
    %cst_92 = arith.constant dense<0.000000e+00> : vector<8x512xf32>
    %178 = tpu.matmul %177, %74, %cst_92 {dimension_numbers = #tpu.dot_dimension_numbers<[1], [0], [0], [1], [0, 0, 1, 1], [], []>} : vector<8x128xbf16>, vector<128x512xbf16>, vector<8x512xf32> -> vector<8x512xf32>
    %179 = arith.addf %176, %178 : vector<8x512xf32>
    %180 = vector.extract_strided_slice %179 {offsets = [0, 0], sizes = [8, 128], strides = [1, 1]} : vector<8x512xf32> to vector<8x128xf32>
    %181 = arith.negf %180 : vector<8x128xf32>
    %182 = math.exp %181 : vector<8x128xf32>
    %cst_93 = arith.constant 1.000000e+00 : f32
    %183 = vector.broadcast %cst_93 : f32 to vector<8x128xf32>
    %184 = arith.addf %183, %182 : vector<8x128xf32>
    %185 = arith.divf %183, %184 : vector<8x128xf32>
    %186 = vector.extract_strided_slice %179 {offsets = [0, 128], sizes = [8, 128], strides = [1, 1]} : vector<8x512xf32> to vector<8x128xf32>
    %187 = arith.negf %186 : vector<8x128xf32>
    %188 = math.exp %187 : vector<8x128xf32>
    %cst_94 = arith.constant 1.000000e+00 : f32
    %189 = vector.broadcast %cst_94 : f32 to vector<8x128xf32>
    %190 = arith.addf %189, %188 : vector<8x128xf32>
    %191 = arith.divf %189, %190 : vector<8x128xf32>
    %192 = vector.extract_strided_slice %179 {offsets = [0, 256], sizes = [8, 128], strides = [1, 1]} : vector<8x512xf32> to vector<8x128xf32>
    %193 = math.tanh %192 : vector<8x128xf32>
    %194 = vector.extract_strided_slice %179 {offsets = [0, 384], sizes = [8, 128], strides = [1, 1]} : vector<8x512xf32> to vector<8x128xf32>
    %195 = arith.negf %194 : vector<8x128xf32>
    %196 = math.exp %195 : vector<8x128xf32>
    %cst_95 = arith.constant 1.000000e+00 : f32
    %197 = vector.broadcast %cst_95 : f32 to vector<8x128xf32>
    %198 = arith.addf %197, %196 : vector<8x128xf32>
    %199 = arith.divf %197, %198 : vector<8x128xf32>
    %200 = arith.mulf %191, %170 : vector<8x128xf32>
    %201 = arith.mulf %185, %193 : vector<8x128xf32>
    %202 = arith.addf %200, %201 : vector<8x128xf32>
    %203 = math.tanh %202 : vector<8x128xf32>
    %204 = arith.mulf %199, %203 : vector<8x128xf32>
    %c4_i32 = arith.constant 4 : i32
    %c8_i32_96 = arith.constant 8 : i32
    %205 = arith.muli %c4_i32, %c8_i32_96 : i32
    %206 = tpu.assume_multiple %205, 8 : i32
    %207 = arith.index_cast %206 : i32 to index
    %c0_97 = arith.constant 0 : index
    %208 = vector.load %arg10[%207, %c0_97] : memref<64x512xf32, #tpu.memory_space<vmem>>, vector<8x512xf32>
    %209 = arith.truncf %204 : vector<8x128xf32> to vector<8x128xbf16>
    %cst_98 = arith.constant dense<0.000000e+00> : vector<8x512xf32>
    %210 = tpu.matmul %209, %74, %cst_98 {dimension_numbers = #tpu.dot_dimension_numbers<[1], [0], [0], [1], [0, 0, 1, 1], [], []>} : vector<8x128xbf16>, vector<128x512xbf16>, vector<8x512xf32> -> vector<8x512xf32>
    %211 = arith.addf %208, %210 : vector<8x512xf32>
    %212 = vector.extract_strided_slice %211 {offsets = [0, 0], sizes = [8, 128], strides = [1, 1]} : vector<8x512xf32> to vector<8x128xf32>
    %213 = arith.negf %212 : vector<8x128xf32>
    %214 = math.exp %213 : vector<8x128xf32>
    %cst_99 = arith.constant 1.000000e+00 : f32
    %215 = vector.broadcast %cst_99 : f32 to vector<8x128xf32>
    %216 = arith.addf %215, %214 : vector<8x128xf32>
    %217 = arith.divf %215, %216 : vector<8x128xf32>
    %218 = vector.extract_strided_slice %211 {offsets = [0, 128], sizes = [8, 128], strides = [1, 1]} : vector<8x512xf32> to vector<8x128xf32>
    %219 = arith.negf %218 : vector<8x128xf32>
    %220 = math.exp %219 : vector<8x128xf32>
    %cst_100 = arith.constant 1.000000e+00 : f32
    %221 = vector.broadcast %cst_100 : f32 to vector<8x128xf32>
    %222 = arith.addf %221, %220 : vector<8x128xf32>
    %223 = arith.divf %221, %222 : vector<8x128xf32>
    %224 = vector.extract_strided_slice %211 {offsets = [0, 256], sizes = [8, 128], strides = [1, 1]} : vector<8x512xf32> to vector<8x128xf32>
    %225 = math.tanh %224 : vector<8x128xf32>
    %226 = vector.extract_strided_slice %211 {offsets = [0, 384], sizes = [8, 128], strides = [1, 1]} : vector<8x512xf32> to vector<8x128xf32>
    %227 = arith.negf %226 : vector<8x128xf32>
    %228 = math.exp %227 : vector<8x128xf32>
    %cst_101 = arith.constant 1.000000e+00 : f32
    %229 = vector.broadcast %cst_101 : f32 to vector<8x128xf32>
    %230 = arith.addf %229, %228 : vector<8x128xf32>
    %231 = arith.divf %229, %230 : vector<8x128xf32>
    %232 = arith.mulf %223, %202 : vector<8x128xf32>
    %233 = arith.mulf %217, %225 : vector<8x128xf32>
    %234 = arith.addf %232, %233 : vector<8x128xf32>
    %235 = math.tanh %234 : vector<8x128xf32>
    %236 = arith.mulf %231, %235 : vector<8x128xf32>
    %c5_i32 = arith.constant 5 : i32
    %c8_i32_102 = arith.constant 8 : i32
    %237 = arith.muli %c5_i32, %c8_i32_102 : i32
    %238 = tpu.assume_multiple %237, 8 : i32
    %239 = arith.index_cast %238 : i32 to index
    %c0_103 = arith.constant 0 : index
    %240 = vector.load %arg10[%239, %c0_103] : memref<64x512xf32, #tpu.memory_space<vmem>>, vector<8x512xf32>
    %241 = arith.truncf %236 : vector<8x128xf32> to vector<8x128xbf16>
    %cst_104 = arith.constant dense<0.000000e+00> : vector<8x512xf32>
    %242 = tpu.matmul %241, %74, %cst_104 {dimension_numbers = #tpu.dot_dimension_numbers<[1], [0], [0], [1], [0, 0, 1, 1], [], []>} : vector<8x128xbf16>, vector<128x512xbf16>, vector<8x512xf32> -> vector<8x512xf32>
    %243 = arith.addf %240, %242 : vector<8x512xf32>
    %244 = vector.extract_strided_slice %243 {offsets = [0, 0], sizes = [8, 128], strides = [1, 1]} : vector<8x512xf32> to vector<8x128xf32>
    %245 = arith.negf %244 : vector<8x128xf32>
    %246 = math.exp %245 : vector<8x128xf32>
    %cst_105 = arith.constant 1.000000e+00 : f32
    %247 = vector.broadcast %cst_105 : f32 to vector<8x128xf32>
    %248 = arith.addf %247, %246 : vector<8x128xf32>
    %249 = arith.divf %247, %248 : vector<8x128xf32>
    %250 = vector.extract_strided_slice %243 {offsets = [0, 128], sizes = [8, 128], strides = [1, 1]} : vector<8x512xf32> to vector<8x128xf32>
    %251 = arith.negf %250 : vector<8x128xf32>
    %252 = math.exp %251 : vector<8x128xf32>
    %cst_106 = arith.constant 1.000000e+00 : f32
    %253 = vector.broadcast %cst_106 : f32 to vector<8x128xf32>
    %254 = arith.addf %253, %252 : vector<8x128xf32>
    %255 = arith.divf %253, %254 : vector<8x128xf32>
    %256 = vector.extract_strided_slice %243 {offsets = [0, 256], sizes = [8, 128], strides = [1, 1]} : vector<8x512xf32> to vector<8x128xf32>
    %257 = math.tanh %256 : vector<8x128xf32>
    %258 = vector.extract_strided_slice %243 {offsets = [0, 384], sizes = [8, 128], strides = [1, 1]} : vector<8x512xf32> to vector<8x128xf32>
    %259 = arith.negf %258 : vector<8x128xf32>
    %260 = math.exp %259 : vector<8x128xf32>
    %cst_107 = arith.constant 1.000000e+00 : f32
    %261 = vector.broadcast %cst_107 : f32 to vector<8x128xf32>
    %262 = arith.addf %261, %260 : vector<8x128xf32>
    %263 = arith.divf %261, %262 : vector<8x128xf32>
    %264 = arith.mulf %255, %234 : vector<8x128xf32>
    %265 = arith.mulf %249, %257 : vector<8x128xf32>
    %266 = arith.addf %264, %265 : vector<8x128xf32>
    %267 = math.tanh %266 : vector<8x128xf32>
    %268 = arith.mulf %263, %267 : vector<8x128xf32>
    %c6_i32 = arith.constant 6 : i32
    %c8_i32_108 = arith.constant 8 : i32
    %269 = arith.muli %c6_i32, %c8_i32_108 : i32
    %270 = tpu.assume_multiple %269, 8 : i32
    %271 = arith.index_cast %270 : i32 to index
    %c0_109 = arith.constant 0 : index
    %272 = vector.load %arg10[%271, %c0_109] : memref<64x512xf32, #tpu.memory_space<vmem>>, vector<8x512xf32>
    %273 = arith.truncf %268 : vector<8x128xf32> to vector<8x128xbf16>
    %cst_110 = arith.constant dense<0.000000e+00> : vector<8x512xf32>
    %274 = tpu.matmul %273, %74, %cst_110 {dimension_numbers = #tpu.dot_dimension_numbers<[1], [0], [0], [1], [0, 0, 1, 1], [], []>} : vector<8x128xbf16>, vector<128x512xbf16>, vector<8x512xf32> -> vector<8x512xf32>
    %275 = arith.addf %272, %274 : vector<8x512xf32>
    %276 = vector.extract_strided_slice %275 {offsets = [0, 0], sizes = [8, 128], strides = [1, 1]} : vector<8x512xf32> to vector<8x128xf32>
    %277 = arith.negf %276 : vector<8x128xf32>
    %278 = math.exp %277 : vector<8x128xf32>
    %cst_111 = arith.constant 1.000000e+00 : f32
    %279 = vector.broadcast %cst_111 : f32 to vector<8x128xf32>
    %280 = arith.addf %279, %278 : vector<8x128xf32>
    %281 = arith.divf %279, %280 : vector<8x128xf32>
    %282 = vector.extract_strided_slice %275 {offsets = [0, 128], sizes = [8, 128], strides = [1, 1]} : vector<8x512xf32> to vector<8x128xf32>
    %283 = arith.negf %282 : vector<8x128xf32>
    %284 = math.exp %283 : vector<8x128xf32>
    %cst_112 = arith.constant 1.000000e+00 : f32
    %285 = vector.broadcast %cst_112 : f32 to vector<8x128xf32>
    %286 = arith.addf %285, %284 : vector<8x128xf32>
    %287 = arith.divf %285, %286 : vector<8x128xf32>
    %288 = vector.extract_strided_slice %275 {offsets = [0, 256], sizes = [8, 128], strides = [1, 1]} : vector<8x512xf32> to vector<8x128xf32>
    %289 = math.tanh %288 : vector<8x128xf32>
    %290 = vector.extract_strided_slice %275 {offsets = [0, 384], sizes = [8, 128], strides = [1, 1]} : vector<8x512xf32> to vector<8x128xf32>
    %291 = arith.negf %290 : vector<8x128xf32>
    %292 = math.exp %291 : vector<8x128xf32>
    %cst_113 = arith.constant 1.000000e+00 : f32
    %293 = vector.broadcast %cst_113 : f32 to vector<8x128xf32>
    %294 = arith.addf %293, %292 : vector<8x128xf32>
    %295 = arith.divf %293, %294 : vector<8x128xf32>
    %296 = arith.mulf %287, %266 : vector<8x128xf32>
    %297 = arith.mulf %281, %289 : vector<8x128xf32>
    %298 = arith.addf %296, %297 : vector<8x128xf32>
    %299 = math.tanh %298 : vector<8x128xf32>
    %300 = arith.mulf %295, %299 : vector<8x128xf32>
    %c7_i32 = arith.constant 7 : i32
    %c8_i32_114 = arith.constant 8 : i32
    %301 = arith.muli %c7_i32, %c8_i32_114 : i32
    %302 = tpu.assume_multiple %301, 8 : i32
    %303 = arith.index_cast %302 : i32 to index
    %c0_115 = arith.constant 0 : index
    %304 = vector.load %arg10[%303, %c0_115] : memref<64x512xf32, #tpu.memory_space<vmem>>, vector<8x512xf32>
    %305 = arith.truncf %300 : vector<8x128xf32> to vector<8x128xbf16>
    %cst_116 = arith.constant dense<0.000000e+00> : vector<8x512xf32>
    %306 = tpu.matmul %305, %74, %cst_116 {dimension_numbers = #tpu.dot_dimension_numbers<[1], [0], [0], [1], [0, 0, 1, 1], [], []>} : vector<8x128xbf16>, vector<128x512xbf16>, vector<8x512xf32> -> vector<8x512xf32>
    %307 = arith.addf %304, %306 : vector<8x512xf32>
    %308 = vector.extract_strided_slice %307 {offsets = [0, 0], sizes = [8, 128], strides = [1, 1]} : vector<8x512xf32> to vector<8x128xf32>
    %309 = arith.negf %308 : vector<8x128xf32>
    %310 = math.exp %309 : vector<8x128xf32>
    %cst_117 = arith.constant 1.000000e+00 : f32
    %311 = vector.broadcast %cst_117 : f32 to vector<8x128xf32>
    %312 = arith.addf %311, %310 : vector<8x128xf32>
    %313 = arith.divf %311, %312 : vector<8x128xf32>
    %314 = vector.extract_strided_slice %307 {offsets = [0, 128], sizes = [8, 128], strides = [1, 1]} : vector<8x512xf32> to vector<8x128xf32>
    %315 = arith.negf %314 : vector<8x128xf32>
    %316 = math.exp %315 : vector<8x128xf32>
    %cst_118 = arith.constant 1.000000e+00 : f32
    %317 = vector.broadcast %cst_118 : f32 to vector<8x128xf32>
    %318 = arith.addf %317, %316 : vector<8x128xf32>
    %319 = arith.divf %317, %318 : vector<8x128xf32>
    %320 = vector.extract_strided_slice %307 {offsets = [0, 256], sizes = [8, 128], strides = [1, 1]} : vector<8x512xf32> to vector<8x128xf32>
    %321 = math.tanh %320 : vector<8x128xf32>
    %322 = vector.extract_strided_slice %307 {offsets = [0, 384], sizes = [8, 128], strides = [1, 1]} : vector<8x512xf32> to vector<8x128xf32>
    %323 = arith.negf %322 : vector<8x128xf32>
    %324 = math.exp %323 : vector<8x128xf32>
    %cst_119 = arith.constant 1.000000e+00 : f32
    %325 = vector.broadcast %cst_119 : f32 to vector<8x128xf32>
    %326 = arith.addf %325, %324 : vector<8x128xf32>
    %327 = arith.divf %325, %326 : vector<8x128xf32>
    %328 = arith.mulf %319, %298 : vector<8x128xf32>
    %329 = arith.mulf %313, %321 : vector<8x128xf32>
    %330 = arith.addf %328, %329 : vector<8x128xf32>
    %331 = math.tanh %330 : vector<8x128xf32>
    %332 = arith.mulf %327, %331 : vector<8x128xf32>
    %c8_i32_120 = arith.constant 8 : i32
    %c0_121 = arith.constant 0 : index
    %c0_122 = arith.constant 0 : index
    %333 = vector.load %arg6[%c0_121, %c0_122] : memref<128x128xf32, #tpu.memory_space<vmem>>, vector<128x128xf32>
    %cst_123 = arith.constant dense<0.000000e+00> : vector<8x128xf32>
    %334 = tpu.matmul %332, %333, %cst_123 {dimension_numbers = #tpu.dot_dimension_numbers<[1], [0], [0], [1], [0, 0, 1, 1], [], []>} : vector<8x128xf32>, vector<128x128xf32>, vector<8x128xf32> -> vector<8x128xf32>
    %c0_124 = arith.constant 0 : index
    %c0_125 = arith.constant 0 : index
    %335 = vector.load %arg7[%c0_124, %c0_125] : memref<1x128xf32, #tpu.memory_space<vmem>>, vector<1x128xf32>
    %336 = vector.broadcast %335 : vector<1x128xf32> to vector<8x128xf32>
    %337 = arith.addf %334, %336 : vector<8x128xf32>
    %cst_126 = arith.constant dense<0xFF800000> : vector<8xf32>
    %338 = vector.multi_reduction <maximumf>, %337, %cst_126 [1] : vector<8x128xf32> to vector<8xf32>
    %339 = vector.shape_cast %338 : vector<8xf32> to vector<8x1xf32>
    %340 = vector.broadcast %339 : vector<8x1xf32> to vector<8x128xf32>
    %341 = arith.subf %337, %340 : vector<8x128xf32>
    %342 = math.exp %341 : vector<8x128xf32>
    %cst_127 = arith.constant dense<0.000000e+00> : vector<8xf32>
    %343 = vector.multi_reduction <add>, %342, %cst_127 [1] : vector<8x128xf32> to vector<8xf32>
    %344 = vector.shape_cast %343 : vector<8xf32> to vector<8x1xf32>
    %345 = tpu.reciprocal %344 {approx = true} : vector<8x1xf32> -> vector<8x1xf32>
    %346 = vector.broadcast %345 : vector<8x1xf32> to vector<8x128xf32>
    %347 = arith.mulf %342, %346 : vector<8x128xf32>
    %c0_128 = arith.constant 0 : index
    %c0_129 = arith.constant 0 : index
    %348 = vector.load %arg8[%c0_128, %c0_129] : memref<8x128xf32, #tpu.memory_space<vmem>>, vector<8x128xf32>
    tpu.vector_store %arg8[%c0_128, %c0_129], %347 {strides = array<i32>} : memref<8x128xf32, #tpu.memory_space<vmem>>, vector<8x128xf32>,
    return
  }
  func.func @transform_0(%arg0: i32, %arg1: memref<2x8xi32, #tpu.memory_space<smem>>) -> (i32, i32) {
    %c0_i32 = arith.constant 0 : i32
    %c0_i32_0 = arith.constant 0 : i32
    %c0_i32_1 = arith.constant 0 : i32
    return %c0_i32, %c0_i32_0 : i32, i32
  }
  func.func @transform_1(%arg0: i32, %arg1: memref<2x8xi32, #tpu.memory_space<smem>>) -> (i32, i32) {
    %c0_i32 = arith.constant 0 : i32
    %c0_i32_0 = arith.constant 0 : i32
    %c0_i32_1 = arith.constant 0 : i32
    return %c0_i32, %c0_i32_0 : i32, i32
  }
  func.func @transform_2(%arg0: i32, %arg1: memref<2x8xi32, #tpu.memory_space<smem>>) -> (i32, i32) {
    %c0_i32 = arith.constant 0 : i32
    %c0_i32_0 = arith.constant 0 : i32
    %c0_i32_1 = arith.constant 0 : i32
    return %c0_i32, %c0_i32_0 : i32, i32
  }
  func.func @transform_3(%arg0: i32, %arg1: memref<2x8xi32, #tpu.memory_space<smem>>) -> (i32, i32) {
    %c0_i32 = arith.constant 0 : i32
    %c0_i32_0 = arith.constant 0 : i32
    %c0_i32_1 = arith.constant 0 : i32
    return %c0_i32, %c0_i32_0 : i32, i32
  }
  func.func @transform_4(%arg0: i32, %arg1: memref<2x8xi32, #tpu.memory_space<smem>>) -> (i32, i32) {
    %c0_i32 = arith.constant 0 : i32
    %c0_i32_0 = arith.constant 0 : i32
    %c0_i32_1 = arith.constant 0 : i32
    return %c0_i32, %c0_i32_0 : i32, i32
  }
  func.func @transform_5(%arg0: i32, %arg1: memref<2x8xi32, #tpu.memory_space<smem>>) -> (i32, i32) {
    %c0_i32 = arith.constant 0 : i32
    %c0_i32_0 = arith.constant 0 : i32
    %c0_i32_1 = arith.constant 0 : i32
    return %c0_i32, %c0_i32_0 : i32, i32
  }
  func.func @transform_6(%arg0: i32, %arg1: memref<2x8xi32, #tpu.memory_space<smem>>) -> (i32, i32) {
    %c0_i32 = arith.constant 0 : i32
    %c0_i32_0 = arith.constant 0 : i32
    %c0_i32_1 = arith.constant 0 : i32
    return %c0_i32, %c0_i32_0 : i32, i32
  }
}

</mosaic_0001>

<llo_original>
// kernel: tpu_custom_call.1
$region0: #{tpu_custom_call.1}
  #allocation0 [shape = 'u32[]', space=smem, size = 0x4, offset = 0x4, fixed_abs, tag = 'smem constant byte address 0x4 - core index']
  #allocation1 [shape = 'u32[144,128]{1,0:T(1,128)}', space=vmem, size = 0x12000, scoped, tag = 'internal scratch']
  #allocation2 [shape = 'f32[64,32]{1,0:T(8,128)}', space=vmem, size = 0x8000, scoped, tag = 'scratch operand']
  #allocation3 [shape = 'f32[64,512]{1,0:T(8,128)}', space=vmem, size = 0x20000, scoped, tag = 'scratch operand']
  #allocation4 [shape = 's32[1]{0}', space=sflag, size = 0x4, scoped, tag = 'scoped memory for tpu_custom_call.1']
  #allocation5 [shape = 'u8[1024]{0}', space=smem, size = 0x400, scoped, tag = 'prefetched SMEM operand 0']
  %s0 = inlined_call_operand.vmem [shape: s32[2,8], index: 0, kind: input, shape index: {}]
  %s1 = inlined_call_operand.vmem [shape: f32[100,32], index: 1, kind: input, shape index: {}]
  %s2 = inlined_call_operand.hbm [shape: bf16[32,512], index: 2, kind: input, shape index: {}]
  %s3 = inlined_call_operand.hbm [shape: bf16[128,512], index: 3, kind: input, shape index: {}]
  %s4 = inlined_call_operand.vmem [shape: f32[1,512], index: 4, kind: input, shape index: {}]
  %s5 = inlined_call_operand.vmem [shape: f32[128,128], index: 5, kind: input, shape index: {}]
  %s6 = inlined_call_operand.vmem [shape: f32[1,128], index: 6, kind: input, shape index: {}]
  %s7 = inlined_call_operand.hbm [shape: f32[8,128], index: 7, kind: output, shape index: {}]
  %s8 = sld [smem:[#allocation0]]
  $region42: #{tpu_custom_call.1} parent=0
    _
  %s10 = ssub.s32 1, %s8
  %s11 = scalar_select 0, %s10, %s8
  %s12 = sshll.u32 %s0, 4
  %s13 = int_to_ptr.vmem [resolvable:$true] %s12
  %15 = dma.vmem_to_smem %s13, 32, [#allocation5], [#allocation4]
  %16 = dma.done [#allocation4], 32
  %17 = sfence
  $region1: #{tpu_custom_call.1} parent=0
    #allocation6 [shape = 'u8[32768]{0}', space=vmem, size = 0x8000, scoped, tag = 'input window, operand 2, single buffered']
    #allocation7 [shape = 's32[1]{0}', space=sflag, size = 0x4, scoped, tag = 'scoped memory for tpu_custom_call.1']
    #allocation8 [shape = 's32[1]{0}', space=sflag, size = 0x4, scoped, tag = 'scoped memory for tpu_custom_call.1']
    #allocation9 [shape = 'u8[131072]{0}', space=vmem, size = 0x20000, scoped, tag = 'input window, operand 3, single buffered']
    #allocation10 [shape = 's32[1]{0}', space=sflag, size = 0x4, scoped, tag = 'scoped memory for tpu_custom_call.1']
    #allocation11 [shape = 'u8[4096]{0}', space=vmem, size = 0x1000, scoped, tag = 'output window, operand 0, single buffered']
    %18 = vsyncpa [#allocation7], 0
    %19 = vsyncpa [#allocation10], 0
    %20 = vsyncpa [#allocation8], 0
    // Predicated region
    $region2: #{tpu_custom_call.1} parent=1 // pred_check
      _
    $region3: #{tpu_custom_call.1} parent=1 // pred_check_branch
      %22 = sbr.rel (0) target = $region5
    $region4: #{tpu_custom_call.1} parent=1 // pred_region
      _
    $region5: #{tpu_custom_call.1} parent=1 // pred_fallthru
      _
    // Predicated region
    $region6: #{tpu_custom_call.1} parent=1 // pred_check
      _
    $region7: #{tpu_custom_call.1} parent=1 // pred_check_branch
      %24 = sbr.rel (0) target = $region9
    $region8: #{tpu_custom_call.1} parent=1 // pred_region
      %s26 = ssub.s32 1024, 1024
      %27 = vsyncadd [#allocation7], %s26
      %s28 = sshll.u32 [#allocation6], 4
      %s29 = int_to_ptr.vmem [resolvable:$true] %s28
      %34 = dma.hbm_to_vmem [thread:$0]  %s2, 1024, %s29, [#allocation7], 256, 256, 16
    $region9: #{tpu_custom_call.1} parent=1 // pred_fallthru
      _
    // Predicated region
    $region10: #{tpu_custom_call.1} parent=1 // pred_check
      _
    $region11: #{tpu_custom_call.1} parent=1 // pred_check_branch
      %36 = sbr.rel (0) target = $region13
    $region12: #{tpu_custom_call.1} parent=1 // pred_region
      %s38 = ssub.s32 4096, 4096
      %39 = vsyncadd [#allocation10], %s38
      %s40 = sshll.u32 [#allocation9], 4
      %s41 = int_to_ptr.vmem [resolvable:$true] %s40
      %46 = dma.hbm_to_vmem [thread:$0]  %s3, 4096, %s41, [#allocation10], 256, 256, 16
    $region13: #{tpu_custom_call.1} parent=1 // pred_fallthru
      _
    // Predicated region
    $region14: #{tpu_custom_call.1} parent=1 // pred_check
      _
    $region15: #{tpu_custom_call.1} parent=1 // pred_check_branch
      %48 = sbr.rel (0) target = $region17
    $region16: #{tpu_custom_call.1} parent=1 // pred_region
      _
    $region17: #{tpu_custom_call.1} parent=1 // pred_fallthru
      _
    // Predicated region
    $region18: #{tpu_custom_call.1} parent=1 // pred_check
      _
    $region19: #{tpu_custom_call.1} parent=1 // pred_check_branch
      %50 = sbr.rel (0) target = $region21
    $region20: #{tpu_custom_call.1} parent=1 // pred_region
      _
    $region21: #{tpu_custom_call.1} parent=1 // pred_fallthru
      _
    // Predicated region
    $region22: #{tpu_custom_call.1} parent=1 // pred_check
      _
    $region23: #{tpu_custom_call.1} parent=1 // pred_check_branch
      %52 = sbr.rel (0) target = $region25
    $region24: #{tpu_custom_call.1} parent=1 // pred_region
      _
    $region25: #{tpu_custom_call.1} parent=1 // pred_fallthru
      _
    // Predicated region
    $region26: #{tpu_custom_call.1} parent=1 // pred_check
      _
    $region27: #{tpu_custom_call.1} parent=1 // pred_check_branch
      %54 = sbr.rel (0) target = $region29
    $region28: #{tpu_custom_call.1} parent=1 // pred_region
      %55 = dma.done [#allocation7], 1024
    $region29: #{tpu_custom_call.1} parent=1 // pred_fallthru
      _
    // Predicated region
    $region30: #{tpu_custom_call.1} parent=1 // pred_check
      _
    $region31: #{tpu_custom_call.1} parent=1 // pred_check_branch
      %57 = sbr.rel (0) target = $region33
    $region32: #{tpu_custom_call.1} parent=1 // pred_region
      %58 = dma.done [#allocation10], 4096
    $region33: #{tpu_custom_call.1} parent=1 // pred_fallthru
      _
    %vm60 = vcmask 261120
    %61 = vst.msk [vmem:[#allocation2] sm:$0xff] %vm60, 0.0
    %62 = vst.msk [vmem:[#allocation2 + $0x8] sm:$0xff] %vm60, 0.0
    %63 = vst.msk [vmem:[#allocation2 + $0x10] sm:$0xff] %vm60, 0.0
    %64 = vst.msk [vmem:[#allocation2 + $0x18] sm:$0xff] %vm60, 0.0
    %65 = vst.msk [vmem:[#allocation2 + $0x20] sm:$0xff] %vm60, 0.0
    %66 = vst.msk [vmem:[#allocation2 + $0x28] sm:$0xff] %vm60, 0.0
    %67 = vst.msk [vmem:[#allocation2 + $0x30] sm:$0xff] %vm60, 0.0
    %68 = vst.msk [vmem:[#allocation2 + $0x38] sm:$0xff] %vm60, 0.0
    %s69 = sld [smem:[#allocation5]]
    %s70 = scalar_lea.vmem %s1, %s69
    %v71 = vld [vmem:[%s70] sm:$0x1]
    %vm72 = vcmask 253952
    %73 = vst.msk [vmem:[#allocation2] sm:$0x1] %vm72, %v71
    %s74 = sld [smem:[#allocation5 + $0x80]]
    %s75 = scalar_lea.vmem %s1, %s74
    %v76 = vld [vmem:[%s75] sm:$0x1]
    %77 = vst.msk [vmem:[#allocation2 + $0x1] sm:$0x1] %vm72, %v76
    %s78 = sld [smem:[#allocation5 + $0x1]]
    %s79 = scalar_lea.vmem %s1, %s78
    %v80 = vld [vmem:[%s79] sm:$0x1]
    %81 = vst.msk [vmem:[#allocation2 + $0x8] sm:$0x1] %vm72, %v80
    %s82 = sld [smem:[#allocation5 + $0x81]]
    %s83 = scalar_lea.vmem %s1, %s82
    %v84 = vld [vmem:[%s83] sm:$0x1]
    %85 = vst.msk [vmem:[#allocation2 + $0x9] sm:$0x1] %vm72, %v84
    %s86 = sld [smem:[#allocation5 + $0x2]]
    %s87 = scalar_lea.vmem %s1, %s86
    %v88 = vld [vmem:[%s87] sm:$0x1]
    %89 = vst.msk [vmem:[#allocation2 + $0x10] sm:$0x1] %vm72, %v88
    %s90 = sld [smem:[#allocation5 + $0x82]]
    %s91 = scalar_lea.vmem %s1, %s90
    %v92 = vld [vmem:[%s91] sm:$0x1]
    %93 = vst.msk [vmem:[#allocation2 + $0x11] sm:$0x1] %vm72, %v92
    %s94 = sld [smem:[#allocation5 + $0x3]]
    %s95 = scalar_lea.vmem %s1, %s94
    %v96 = vld [vmem:[%s95] sm:$0x1]
    %97 = vst.msk [vmem:[#allocation2 + $0x18] sm:$0x1] %vm72, %v96
    %s98 = sld [smem:[#allocation5 + $0x83]]
    %s99 = scalar_lea.vmem %s1, %s98
    %v100 = vld [vmem:[%s99] sm:$0x1]
    %101 = vst.msk [vmem:[#allocation2 + $0x19] sm:$0x1] %vm72, %v100
    %s102 = sld [smem:[#allocation5 + $0x4]]
    %s103 = scalar_lea.vmem %s1, %s102
    %v104 = vld [vmem:[%s103] sm:$0x1]
    %105 = vst.msk [vmem:[#allocation2 + $0x20] sm:$0x1] %vm72, %v104
    %s106 = sld [smem:[#allocation5 + $0x84]]
    %s107 = scalar_lea.vmem %s1, %s106
    %v108 = vld [vmem:[%s107] sm:$0x1]
    %109 = vst.msk [vmem:[#allocation2 + $0x21] sm:$0x1] %vm72, %v108
    %s110 = sld [smem:[#allocation5 + $0x5]]
    %s111 = scalar_lea.vmem %s1, %s110
    %v112 = vld [vmem:[%s111] sm:$0x1]
    %113 = vst.msk [vmem:[#allocation2 + $0x28] sm:$0x1] %vm72, %v112
    %s114 = sld [smem:[#allocation5 + $0x85]]
    %s115 = scalar_lea.vmem %s1, %s114
    %v116 = vld [vmem:[%s115] sm:$0x1]
    %117 = vst.msk [vmem:[#allocation2 + $0x29] sm:$0x1] %vm72, %v116
    %s118 = sld [smem:[#allocation5 + $0x6]]
    %s119 = scalar_lea.vmem %s1, %s118
    %v120 = vld [vmem:[%s119] sm:$0x1]
    %121 = vst.msk [vmem:[#allocation2 + $0x30] sm:$0x1] %vm72, %v120
    %s122 = sld [smem:[#allocation5 + $0x86]]
    %s123 = scalar_lea.vmem %s1, %s122
    %v124 = vld [vmem:[%s123] sm:$0x1]
    %125 = vst.msk [vmem:[#allocation2 + $0x31] sm:$0x1] %vm72, %v124
    %s126 = sld [smem:[#allocation5 + $0x7]]
    %s127 = scalar_lea.vmem %s1, %s126
    %v128 = vld [vmem:[%s127] sm:$0x1]
    %129 = vst.msk [vmem:[#allocation2 + $0x38] sm:$0x1] %vm72, %v128
    %s130 = sld [smem:[#allocation5 + $0x87]]
    %s131 = scalar_lea.vmem %s1, %s130
    %v132 = vld [vmem:[%s131] sm:$0x1]
    %133 = vst.msk [vmem:[#allocation2 + $0x39] sm:$0x1] %vm72, %v132
    %v134 = vld [vmem:[#allocation2] sm:$0xff]
    %v135 = vld [vmem:[#allocation2 + $0x8] sm:$0xff]
    %v136 = vld [vmem:[#allocation2 + $0x10] sm:$0xff]
    %v137 = vld [vmem:[#allocation2 + $0x18] sm:$0xff]
    %v138 = vld [vmem:[#allocation2 + $0x20] sm:$0xff]
    %v139 = vld [vmem:[#allocation2 + $0x28] sm:$0xff]
    %v140 = vld [vmem:[#allocation2 + $0x30] sm:$0xff]
    %v141 = vld [vmem:[#allocation2 + $0x38] sm:$0xff]
    %v142 = vpack.c.bf16 %v135, %v134
    %v143 = vpack.c.bf16 %v137, %v136
    %v144 = vpack.c.bf16 %v139, %v138
    %v145 = vpack.c.bf16 %v141, %v140
    %v146 = vld [vmem:[#allocation6] sm:$0xff]
    %v147 = vld [vmem:[#allocation6 + $0x8] sm:$0xff]
    %v148 = vld [vmem:[#allocation6 + $0x10] sm:$0xff]
    %v149 = vld [vmem:[#allocation6 + $0x18] sm:$0xff]
    %v150 = vld [vmem:[#allocation6 + $0x20] sm:$0xff]
    %v151 = vld [vmem:[#allocation6 + $0x28] sm:$0xff]
    %v152 = vld [vmem:[#allocation6 + $0x30] sm:$0xff]
    %v153 = vld [vmem:[#allocation6 + $0x38] sm:$0xff]
    %v154 = vld [vmem:[%s4] sm:$0xf]
    %v156 = vlaneseq
    %v157 = vshrl.u32 %v156, 7
    %v158 = vsub.s32 0, %v157
    %v159 = vrot.slane %v154, %v158
    %v160 = vlaneseq
    %v161 = vshrl.u32 %v160, 7
    %v162 = vsub.s32 1, %v161
    %v163 = vrot.slane %v154, %v162
    %v164 = vlaneseq
    %v165 = vshrl.u32 %v164, 7
    %v166 = vsub.s32 2, %v165
    %v167 = vrot.slane %v154, %v166
    %v168 = vlaneseq
    %v169 = vshrl.u32 %v168, 7
    %v170 = vsub.s32 3, %v169
    %v171 = vrot.slane %v154, %v170
    %v184 = vunpack.c.l.b16 %v146
    %v185 = vunpack.c.h.b16 %v146
    %v186 = vunpack.c.l.b16 %v147
    %v187 = vunpack.c.h.b16 %v147
    %v188 = vunpack.c.l.b16 %v148
    %v189 = vunpack.c.h.b16 %v148
    %v190 = vunpack.c.l.b16 %v149
    %v191 = vunpack.c.h.b16 %v149
    %v192 = vunpack.c.l.b16 %v150
    %v193 = vunpack.c.h.b16 %v150
    %v194 = vunpack.c.l.b16 %v151
    %v195 = vunpack.c.h.b16 %v151
    %v196 = vunpack.c.l.b16 %v152
    %v197 = vunpack.c.h.b16 %v152
    %v198 = vunpack.c.l.b16 %v153
    %v199 = vunpack.c.h.b16 %v153
    %v200 = vpack.c.b16 %v188, %v184
    %v201 = vpack.c.b16 %v189, %v185
    %v202 = vpack.c.b16 %v190, %v186
    %v203 = vpack.c.b16 %v191, %v187
    %v204 = vpack.c.b16 %v196, %v192
    %v205 = vpack.c.b16 %v197, %v193
    %v206 = vpack.c.b16 %v198, %v194
    %v207 = vpack.c.b16 %v199, %v195
    %v217 = vsel %vm60, %v142, 0
    %v220 = vsel %vm60, %v143, 0
    %v223 = vsel %vm60, %v144, 0
    %v226 = vsel %vm60, %v145, 0
    %228 = vmatprep.subr.bf16.mxu0 %v201
    %229 = vmatpush1.bf16.msra.mxu0 %v200
    %230 = vmatprep.subr.bf16.mxu0 %v205
    %231 = vmatpush1.bf16.msra.mxu0 %v204
    %232 = vmatprep.subr.bf16.mxu0 0
    %233 = vmatpush1.bf16.msra.mxu0 0
    %234 = vmatprep.subr.bf16.mxu0 0
    %235 = vmatpush1.bf16.msra.mxu0 0
    %236 = vmatprep.subr.bf16.mxu0 0
    %237 = vmatpush1.bf16.msra.mxu0 0
    %238 = vmatprep.subr.bf16.mxu0 0
    %239 = vmatpush1.bf16.msra.mxu0 0
    %240 = vmatprep.subr.bf16.mxu0 0
    %241 = vmatpush1.bf16.msra.mxu0 0
    %242 = vmatprep.subr.bf16.mxu0 0
    %243 = vmatpush1.bf16.msra.mxu0 0
    %244 = vmatprep.subr.bf16.mxu0 0
    %245 = vmatpush1.bf16.msra.mxu0 0
    %246 = vmatprep.subr.bf16.mxu0 0
    %247 = vmatpush1.bf16.msra.mxu0 0
    %248 = vmatprep.subr.bf16.mxu0 0
    %249 = vmatpush1.bf16.msra.mxu0 0
    %250 = vmatprep.subr.bf16.mxu0 0
    %251 = vmatpush1.bf16.msra.mxu0 0
    %252 = vmatprep.subr.bf16.mxu0 0
    %253 = vmatpush1.bf16.msra.mxu0 0
    %254 = vmatprep.subr.bf16.mxu0 0
    %255 = vmatpush1.bf16.msra.mxu0 0
    %256 = vmatprep.subr.bf16.mxu0 0
    %257 = vmatpush1.bf16.msra.mxu0 0
    %258 = vmatprep.subr.bf16.mxu0 0
    %259 = vmatpush1.bf16.msra.mxu0 0
    %260 = vmatprep.mubr.bf16.mxu0 0
    %261 = vmatmul.mubr.bf16.gmra.mrb[0].mxu0 %v217
    %v262 = vpop.f32.mrb[0].mxu0
    %v263 = vadd.f32 %v159, %v262
    %v264 = vpop.f32.mrb[0].mxu0
    %v265 = vadd.f32 %v163, %v264
    %v266 = vpop.f32.mrb[0].mxu0
    %v267 = vadd.f32 %v159, %v266
    %v268 = vpop.f32.mrb[0].mxu0
    %v269 = vadd.f32 %v163, %v268
    %270 = vmatprep.mubr.bf16.mxu0 0
    %271 = vmatmul.mubr.bf16.gmra.mrb[0].mxu0 %v220
    %v272 = vpop.f32.mrb[0].mxu0
    %v273 = vadd.f32 %v159, %v272
    %v274 = vpop.f32.mrb[0].mxu0
    %v275 = vadd.f32 %v163, %v274
    %v276 = vpop.f32.mrb[0].mxu0
    %v277 = vadd.f32 %v159, %v276
    %v278 = vpop.f32.mrb[0].mxu0
    %v279 = vadd.f32 %v163, %v278
    %280 = vmatprep.mubr.bf16.mxu0 0
    %281 = vmatmul.mubr.bf16.gmra.mrb[0].mxu0 %v223
    %v282 = vpop.f32.mrb[0].mxu0
    %v283 = vadd.f32 %v159, %v282
    %v284 = vpop.f32.mrb[0].mxu0
    %v285 = vadd.f32 %v163, %v284
    %v286 = vpop.f32.mrb[0].mxu0
    %v287 = vadd.f32 %v159, %v286
    %v288 = vpop.f32.mrb[0].mxu0
    %v289 = vadd.f32 %v163, %v288
    %290 = vmatprep.mubr.bf16.mxu0 0
    %291 = vmatmul.mubr.bf16.gmra.mrb[0].mxu0 %v226
    %v292 = vpop.f32.mrb[0].mxu0
    %v293 = vadd.f32 %v159, %v292
    %v294 = vpop.f32.mrb[0].mxu0
    %v295 = vadd.f32 %v163, %v294
    %v296 = vpop.f32.mrb[0].mxu0
    %v297 = vadd.f32 %v159, %v296
    %v298 = vpop.f32.mrb[0].mxu0
    %v299 = vadd.f32 %v163, %v298
    %300 = vdwg.mxu0
    %301 = vmatprep.subr.bf16.mxu0 %v203
    %302 = vmatpush1.bf16.msra.mxu0 %v202
    %303 = vmatprep.subr.bf16.mxu0 %v207
    %304 = vmatpush1.bf16.msra.mxu0 %v206
    %305 = vmatprep.subr.bf16.mxu0 0
    %306 = vmatpush1.bf16.msra.mxu0 0
    %307 = vmatprep.subr.bf16.mxu0 0
    %308 = vmatpush1.bf16.msra.mxu0 0
    %309 = vmatprep.subr.bf16.mxu0 0
    %310 = vmatpush1.bf16.msra.mxu0 0
    %311 = vmatprep.subr.bf16.mxu0 0
    %312 = vmatpush1.bf16.msra.mxu0 0
    %313 = vmatprep.subr.bf16.mxu0 0
    %314 = vmatpush1.bf16.msra.mxu0 0
    %315 = vmatprep.subr.bf16.mxu0 0
    %316 = vmatpush1.bf16.msra.mxu0 0
    %317 = vmatprep.subr.bf16.mxu0 0
    %318 = vmatpush1.bf16.msra.mxu0 0
    %319 = vmatprep.subr.bf16.mxu0 0
    %320 = vmatpush1.bf16.msra.mxu0 0
    %321 = vmatprep.subr.bf16.mxu0 0
    %322 = vmatpush1.bf16.msra.mxu0 0
    %323 = vmatprep.subr.bf16.mxu0 0
    %324 = vmatpush1.bf16.msra.mxu0 0
    %325 = vmatprep.subr.bf16.mxu0 0
    %326 = vmatpush1.bf16.msra.mxu0 0
    %327 = vmatprep.subr.bf16.mxu0 0
    %328 = vmatpush1.bf16.msra.mxu0 0
    %329 = vmatprep.subr.bf16.mxu0 0
    %330 = vmatpush1.bf16.msra.mxu0 0
    %331 = vmatprep.subr.bf16.mxu0 0
    %332 = vmatpush1.bf16.msra.mxu0 0
    %333 = vmatprep.mubr.bf16.mxu0 0
    %334 = vmatmul.mubr.bf16.gmra.mrb[0].mxu0 %v217
    %v335 = vpop.f32.mrb[0].mxu0
    %v336 = vadd.f32 %v167, %v335
    %v337 = vpop.f32.mrb[0].mxu0
    %v338 = vadd.f32 %v171, %v337
    %v339 = vpop.f32.mrb[0].mxu0
    %v340 = vadd.f32 %v167, %v339
    %v341 = vpop.f32.mrb[0].mxu0
    %v342 = vadd.f32 %v171, %v341
    %343 = vmatprep.mubr.bf16.mxu0 0
    %344 = vmatmul.mubr.bf16.gmra.mrb[0].mxu0 %v220
    %v345 = vpop.f32.mrb[0].mxu0
    %v346 = vadd.f32 %v167, %v345
    %v347 = vpop.f32.mrb[0].mxu0
    %v348 = vadd.f32 %v171, %v347
    %v349 = vpop.f32.mrb[0].mxu0
    %v350 = vadd.f32 %v167, %v349
    %v351 = vpop.f32.mrb[0].mxu0
    %v352 = vadd.f32 %v171, %v351
    %353 = vmatprep.mubr.bf16.mxu0 0
    %354 = vmatmul.mubr.bf16.gmra.mrb[0].mxu0 %v223
    %v355 = vpop.f32.mrb[0].mxu0
    %v356 = vadd.f32 %v167, %v355
    %v357 = vpop.f32.mrb[0].mxu0
    %v358 = vadd.f32 %v171, %v357
    %v359 = vpop.f32.mrb[0].mxu0
    %v360 = vadd.f32 %v167, %v359
    %v361 = vpop.f32.mrb[0].mxu0
    %v362 = vadd.f32 %v171, %v361
    %363 = vmatprep.mubr.bf16.mxu0 0
    %364 = vmatmul.mubr.bf16.gmra.mrb[0].mxu0 %v226
    %v365 = vpop.f32.mrb[0].mxu0
    %v366 = vadd.f32 %v167, %v365
    %v367 = vpop.f32.mrb[0].mxu0
    %v368 = vadd.f32 %v171, %v367
    %v369 = vpop.f32.mrb[0].mxu0
    %v370 = vadd.f32 %v167, %v369
    %v371 = vpop.f32.mrb[0].mxu0
    %v372 = vadd.f32 %v171, %v371
    %373 = vdwg.mxu0
    %374 = vst [vmem:[#allocation3] sm:$0xff] %v263
    %375 = vst [vmem:[#allocation3 + $0x8] sm:$0xff] %v265
    %376 = vst [vmem:[#allocation3 + $0x10] sm:$0xff] %v336
    %377 = vst [vmem:[#allocation3 + $0x18] sm:$0xff] %v338
    %378 = vst [vmem:[#allocation3 + $0x20] sm:$0xff] %v267
    %379 = vst [vmem:[#allocation3 + $0x28] sm:$0xff] %v269
    %380 = vst [vmem:[#allocation3 + $0x30] sm:$0xff] %v340
    %381 = vst [vmem:[#allocation3 + $0x38] sm:$0xff] %v342
    %382 = vst [vmem:[#allocation3 + $0x40] sm:$0xff] %v273
    %383 = vst [vmem:[#allocation3 + $0x48] sm:$0xff] %v275
    %384 = vst [vmem:[#allocation3 + $0x50] sm:$0xff] %v346
    %385 = vst [vmem:[#allocation3 + $0x58] sm:$0xff] %v348
    %386 = vst [vmem:[#allocation3 + $0x60] sm:$0xff] %v277
    %387 = vst [vmem:[#allocation3 + $0x68] sm:$0xff] %v279
    %388 = vst [vmem:[#allocation3 + $0x70] sm:$0xff] %v350
    %389 = vst [vmem:[#allocation3 + $0x78] sm:$0xff] %v352
    %390 = vst [vmem:[#allocation3 + $0x80] sm:$0xff] %v283
    %391 = vst [vmem:[#allocation3 + $0x88] sm:$0xff] %v285
    %392 = vst [vmem:[#allocation3 + $0x90] sm:$0xff] %v356
    %393 = vst [vmem:[#allocation3 + $0x98] sm:$0xff] %v358
    %394 = vst [vmem:[#allocation3 + $0xa0] sm:$0xff] %v287
    %395 = vst [vmem:[#allocation3 + $0xa8] sm:$0xff] %v289
    %396 = vst [vmem:[#allocation3 + $0xb0] sm:$0xff] %v360
    %397 = vst [vmem:[#allocation3 + $0xb8] sm:$0xff] %v362
    %398 = vst [vmem:[#allocation3 + $0xc0] sm:$0xff] %v293
    %399 = vst [vmem:[#allocation3 + $0xc8] sm:$0xff] %v295
    %400 = vst [vmem:[#allocation3 + $0xd0] sm:$0xff] %v366
    %401 = vst [vmem:[#allocation3 + $0xd8] sm:$0xff] %v368
    %402 = vst [vmem:[#allocation3 + $0xe0] sm:$0xff] %v297
    %403 = vst [vmem:[#allocation3 + $0xe8] sm:$0xff] %v299
    %404 = vst [vmem:[#allocation3 + $0xf0] sm:$0xff] %v370
    %405 = vst [vmem:[#allocation3 + $0xf8] sm:$0xff] %v372
    %v406 = vld [vmem:[#allocation9] sm:$0xff]
    %v407 = vld [vmem:[#allocation9 + $0x8] sm:$0xff]
    %v408 = vld [vmem:[#allocation9 + $0x10] sm:$0xff]
    %v409 = vld [vmem:[#allocation9 + $0x18] sm:$0xff]
    %v410 = vld [vmem:[#allocation9 + $0x20] sm:$0xff]
    %v411 = vld [vmem:[#allocation9 + $0x28] sm:$0xff]
    %v412 = vld [vmem:[#allocation9 + $0x30] sm:$0xff]
    %v413 = vld [vmem:[#allocation9 + $0x38] sm:$0xff]
    %v414 = vld [vmem:[#allocation9 + $0x40] sm:$0xff]
    %v415 = vld [vmem:[#allocation9 + $0x48] sm:$0xff]
    %v416 = vld [vmem:[#allocation9 + $0x50] sm:$0xff]
    %v417 = vld [vmem:[#allocation9 + $0x58] sm:$0xff]
    %v418 = vld [vmem:[#allocation9 + $0x60] sm:$0xff]
    %v419 = vld [vmem:[#allocation9 + $0x68] sm:$0xff]
    %v420 = vld [vmem:[#allocation9 + $0x70] sm:$0xff]
    %v421 = vld [vmem:[#allocation9 + $0x78] sm:$0xff]
    %v422 = vld [vmem:[#allocation9 + $0x80] sm:$0xff]
    %v423 = vld [vmem:[#allocation9 + $0x88] sm:$0xff]
    %v424 = vld [vmem:[#allocation9 + $0x90] sm:$0xff]
    %v425 = vld [vmem:[#allocation9 + $0x98] sm:$0xff]
    %v426 = vld [vmem:[#allocation9 + $0xa0] sm:$0xff]
    %v427 = vld [vmem:[#allocation9 + $0xa8] sm:$0xff]
    %v428 = vld [vmem:[#allocation9 + $0xb0] sm:$0xff]
    %v429 = vld [vmem:[#allocation9 + $0xb8] sm:$0xff]
    %v430 = vld [vmem:[#allocation9 + $0xc0] sm:$0xff]
    %v431 = vld [vmem:[#allocation9 + $0xc8] sm:$0xff]
    %v432 = vld [vmem:[#allocation9 + $0xd0] sm:$0xff]
    %v433 = vld [vmem:[#allocation9 + $0xd8] sm:$0xff]
    %v434 = vld [vmem:[#allocation9 + $0xe0] sm:$0xff]
    %v435 = vld [vmem:[#allocation9 + $0xe8] sm:$0xff]
    %v436 = vld [vmem:[#allocation9 + $0xf0] sm:$0xff]
    %v437 = vld [vmem:[#allocation9 + $0xf8] sm:$0xff]
    %s438 = smul.u32 0, 4
    %s439 = smul.addr %s438, 8
    %s440 = scalar_lea.vmem [#allocation3], %s439
    %v441 = vld [vmem:[%s440] sm:$0xff]
    %v442 = vld [vmem:[%s440 + $0x8] sm:$0xff]
    %v443 = vld [vmem:[%s440 + $0x10] sm:$0xff]
    %v444 = vld [vmem:[%s440 + $0x18] sm:$0xff]
    %v477 = vunpack.c.l.b16 %v406
    %v478 = vunpack.c.h.b16 %v406
    %v479 = vunpack.c.l.b16 %v407
    %v480 = vunpack.c.h.b16 %v407
    %v481 = vunpack.c.l.b16 %v408
    %v482 = vunpack.c.h.b16 %v408
    %v483 = vunpack.c.l.b16 %v409
    %v484 = vunpack.c.h.b16 %v409
    %v485 = vunpack.c.l.b16 %v410
    %v486 = vunpack.c.h.b16 %v410
    %v487 = vunpack.c.l.b16 %v411
    %v488 = vunpack.c.h.b16 %v411
    %v489 = vunpack.c.l.b16 %v412
    %v490 = vunpack.c.h.b16 %v412
    %v491 = vunpack.c.l.b16 %v413
    %v492 = vunpack.c.h.b16 %v413
    %v493 = vunpack.c.l.b16 %v414
    %v494 = vunpack.c.h.b16 %v414
    %v495 = vunpack.c.l.b16 %v415
    %v496 = vunpack.c.h.b16 %v415
    %v497 = vunpack.c.l.b16 %v416
    %v498 = vunpack.c.h.b16 %v416
    %v499 = vunpack.c.l.b16 %v417
    %v500 = vunpack.c.h.b16 %v417
    %v501 = vunpack.c.l.b16 %v418
    %v502 = vunpack.c.h.b16 %v418
    %v503 = vunpack.c.l.b16 %v419
    %v504 = vunpack.c.h.b16 %v419
    %v505 = vunpack.c.l.b16 %v420
    %v506 = vunpack.c.h.b16 %v420
    %v507 = vunpack.c.l.b16 %v421
    %v508 = vunpack.c.h.b16 %v421
    %v509 = vunpack.c.l.b16 %v422
    %v510 = vunpack.c.h.b16 %v422
    %v511 = vunpack.c.l.b16 %v423
    %v512 = vunpack.c.h.b16 %v423
    %v513 = vunpack.c.l.b16 %v424
    %v514 = vunpack.c.h.b16 %v424
    %v515 = vunpack.c.l.b16 %v425
    %v516 = vunpack.c.h.b16 %v425
    %v517 = vunpack.c.l.b16 %v426
    %v518 = vunpack.c.h.b16 %v426
    %v519 = vunpack.c.l.b16 %v427
    %v520 = vunpack.c.h.b16 %v427
    %v521 = vunpack.c.l.b16 %v428
    %v522 = vunpack.c.h.b16 %v428
    %v523 = vunpack.c.l.b16 %v429
    %v524 = vunpack.c.h.b16 %v429
    %v525 = vunpack.c.l.b16 %v430
    %v526 = vunpack.c.h.b16 %v430
    %v527 = vunpack.c.l.b16 %v431
    %v528 = vunpack.c.h.b16 %v431
    %v529 = vunpack.c.l.b16 %v432
    %v530 = vunpack.c.h.b16 %v432
    %v531 = vunpack.c.l.b16 %v433
    %v532 = vunpack.c.h.b16 %v433
    %v533 = vunpack.c.l.b16 %v434
    %v534 = vunpack.c.h.b16 %v434
    %v535 = vunpack.c.l.b16 %v435
    %v536 = vunpack.c.h.b16 %v435
    %v537 = vunpack.c.l.b16 %v436
    %v538 = vunpack.c.h.b16 %v436
    %v539 = vunpack.c.l.b16 %v437
    %v540 = vunpack.c.h.b16 %v437
    %v541 = vpack.c.b16 %v481, %v477
    %v542 = vpack.c.b16 %v482, %v478
    %v543 = vpack.c.b16 %v483, %v479
    %v544 = vpack.c.b16 %v484, %v480
    %v545 = vpack.c.b16 %v489, %v485
    %v546 = vpack.c.b16 %v490, %v486
    %v547 = vpack.c.b16 %v491, %v487
    %v548 = vpack.c.b16 %v492, %v488
    %v549 = vpack.c.b16 %v497, %v493
    %v550 = vpack.c.b16 %v498, %v494
    %v551 = vpack.c.b16 %v499, %v495
    %v552 = vpack.c.b16 %v500, %v496
    %v553 = vpack.c.b16 %v505, %v501
    %v554 = vpack.c.b16 %v506, %v502
    %v555 = vpack.c.b16 %v507, %v503
    %v556 = vpack.c.b16 %v508, %v504
    %v557 = vpack.c.b16 %v513, %v509
    %v558 = vpack.c.b16 %v514, %v510
    %v559 = vpack.c.b16 %v515, %v511
    %v560 = vpack.c.b16 %v516, %v512
    %v561 = vpack.c.b16 %v521, %v517
    %v562 = vpack.c.b16 %v522, %v518
    %v563 = vpack.c.b16 %v523, %v519
    %v564 = vpack.c.b16 %v524, %v520
    %v565 = vpack.c.b16 %v529, %v525
    %v566 = vpack.c.b16 %v530, %v526
    %v567 = vpack.c.b16 %v531, %v527
    %v568 = vpack.c.b16 %v532, %v528
    %v569 = vpack.c.b16 %v537, %v533
    %v570 = vpack.c.b16 %v538, %v534
    %v571 = vpack.c.b16 %v539, %v535
    %v572 = vpack.c.b16 %v540, %v536
    %605 = vmatprep.subr.bf16.mxu0 %v542
    %606 = vmatpush1.bf16.msra.mxu0 %v541
    %607 = vmatprep.subr.bf16.mxu0 %v546
    %608 = vmatpush1.bf16.msra.mxu0 %v545
    %609 = vmatprep.subr.bf16.mxu0 %v550
    %610 = vmatpush1.bf16.msra.mxu0 %v549
    %611 = vmatprep.subr.bf16.mxu0 %v554
    %612 = vmatpush1.bf16.msra.mxu0 %v553
    %613 = vmatprep.subr.bf16.mxu0 %v558
    %614 = vmatpush1.bf16.msra.mxu0 %v557
    %615 = vmatprep.subr.bf16.mxu0 %v562
    %616 = vmatpush1.bf16.msra.mxu0 %v561
    %617 = vmatprep.subr.bf16.mxu0 %v566
    %618 = vmatpush1.bf16.msra.mxu0 %v565
    %619 = vmatprep.subr.bf16.mxu0 %v570
    %620 = vmatpush1.bf16.msra.mxu0 %v569
    %621 = vmatprep.subr.bf16.mxu0 0
    %622 = vmatpush1.bf16.msra.mxu0 0
    %623 = vmatprep.subr.bf16.mxu0 0
    %624 = vmatpush1.bf16.msra.mxu0 0
    %625 = vmatprep.subr.bf16.mxu0 0
    %626 = vmatpush1.bf16.msra.mxu0 0
    %627 = vmatprep.subr.bf16.mxu0 0
    %628 = vmatpush1.bf16.msra.mxu0 0
    %629 = vmatprep.subr.bf16.mxu0 0
    %630 = vmatpush1.bf16.msra.mxu0 0
    %631 = vmatprep.subr.bf16.mxu0 0
    %632 = vmatpush1.bf16.msra.mxu0 0
    %633 = vmatprep.subr.bf16.mxu0 0
    %634 = vmatpush1.bf16.msra.mxu0 0
    %635 = vmatprep.subr.bf16.mxu0 0
    %636 = vmatpush1.bf16.msra.mxu0 0
    %637 = vmatprep.mubr.bf16.mxu0 0
    %638 = vmatmul.mubr.bf16.gmra.mrb[0].mxu0 0
    %v639 = vpop.f32.mrb[0].mxu0
    %v640 = vadd.f32 0.0, %v639
    %v641 = vpop.f32.mrb[0].mxu0
    %v642 = vadd.f32 0.0, %v641
    %v643 = vpop.f32.mrb[0].mxu0
    %v644 = vpop.f32.mrb[0].mxu0
    %645 = vdwg.mxu0
    %646 = vmatprep.subr.bf16.mxu0 %v544
    %647 = vmatpush1.bf16.msra.mxu0 %v543
    %648 = vmatprep.subr.bf16.mxu0 %v548
    %649 = vmatpush1.bf16.msra.mxu0 %v547
    %650 = vmatprep.subr.bf16.mxu0 %v552
    %651 = vmatpush1.bf16.msra.mxu0 %v551
    %652 = vmatprep.subr.bf16.mxu0 %v556
    %653 = vmatpush1.bf16.msra.mxu0 %v555
    %654 = vmatprep.subr.bf16.mxu0 %v560
    %655 = vmatpush1.bf16.msra.mxu0 %v559
    %656 = vmatprep.subr.bf16.mxu0 %v564
    %657 = vmatpush1.bf16.msra.mxu0 %v563
    %658 = vmatprep.subr.bf16.mxu0 %v568
    %659 = vmatpush1.bf16.msra.mxu0 %v567
    %660 = vmatprep.subr.bf16.mxu0 %v572
    %661 = vmatpush1.bf16.msra.mxu0 %v571
    %662 = vmatprep.subr.bf16.mxu0 0
    %663 = vmatpush1.bf16.msra.mxu0 0
    %664 = vmatprep.subr.bf16.mxu0 0
    %665 = vmatpush1.bf16.msra.mxu0 0
    %666 = vmatprep.subr.bf16.mxu0 0
    %667 = vmatpush1.bf16.msra.mxu0 0
    %668 = vmatprep.subr.bf16.mxu0 0
    %669 = vmatpush1.bf16.msra.mxu0 0
    %670 = vmatprep.subr.bf16.mxu0 0
    %671 = vmatpush1.bf16.msra.mxu0 0
    %672 = vmatprep.subr.bf16.mxu0 0
    %673 = vmatpush1.bf16.msra.mxu0 0
    %674 = vmatprep.subr.bf16.mxu0 0
    %675 = vmatpush1.bf16.msra.mxu0 0
    %676 = vmatprep.subr.bf16.mxu0 0
    %677 = vmatpush1.bf16.msra.mxu0 0
    %678 = vmatprep.mubr.bf16.mxu0 0
    %679 = vmatmul.mubr.bf16.gmra.mrb[0].mxu0 0
    %v680 = vpop.f32.mrb[0].mxu0
    %v681 = vadd.f32 0.0, %v680
    %v682 = vpop.f32.mrb[0].mxu0
    %v683 = vadd.f32 0.0, %v682
    %v684 = vpop.f32.mrb[0].mxu0
    %v685 = vpop.f32.mrb[0].mxu0
    %686 = vdwg.mxu0
    %v687 = vadd.f32 %v441, %v640
    %v688 = vadd.f32 %v442, %v642
    %v689 = vadd.f32 %v443, %v681
    %v690 = vadd.f32 %v444, %v683
    %v691 = vxor.u32 %v687, 2147483648
    %v692 = vmul.f32 %v691, 1.442695
    %v693 = vpow.pop %v692
    %v694 = vadd.f32 %v693, 1.0
    %v695 = vrcp.pop %v694
    %v696 = vmul.f32 1.0, %v695
    %v697 = vxor.u32 %v688, 2147483648
    %v698 = vmul.f32 %v697, 1.442695
    %v699 = vpow.pop %v698
    %v700 = vadd.f32 %v699, 1.0
    %v701 = vrcp.pop %v700
    %v702 = vmul.f32 1.0, %v701
    %v703 = vtanh.pop %v689
    %v704 = vxor.u32 %v690, 2147483648
    %v705 = vmul.f32 %v704, 1.442695
    %v706 = vpow.pop %v705
    %v707 = vadd.f32 %v706, 1.0
    %v708 = vrcp.pop %v707
    %v709 = vmul.f32 1.0, %v708
    %v710 = vmul.f32 %v702, 0.0
    %v711 = vmul.f32 %v696, %v703
    %v712 = vadd.f32 %v710, %v711
    %v713 = vtanh.pop %v712
    %v714 = vmul.f32 %v709, %v713
    %s715 = smul.u32 1, 4
    %s716 = smul.addr %s715, 8
    %s717 = scalar_lea.vmem [#allocation3], %s716
    %v718 = vld [vmem:[%s717] sm:$0xff]
    %v719 = vld [vmem:[%s717 + $0x8] sm:$0xff]
    %v720 = vld [vmem:[%s717 + $0x10] sm:$0xff]
    %v721 = vld [vmem:[%s717 + $0x18] sm:$0xff]
    %v722 = vpack.c.bf16 %v714, %v714
    %723 = vmatprep.subr.bf16.mxu0 %v542
    %724 = vmatpush1.bf16.msra.mxu0 %v541
    %725 = vmatprep.subr.bf16.mxu0 %v546
    %726 = vmatpush1.bf16.msra.mxu0 %v545
    %727 = vmatprep.subr.bf16.mxu0 %v550
    %728 = vmatpush1.bf16.msra.mxu0 %v549
    %729 = vmatprep.subr.bf16.mxu0 %v554
    %730 = vmatpush1.bf16.msra.mxu0 %v553
    %731 = vmatprep.subr.bf16.mxu0 %v558
    %732 = vmatpush1.bf16.msra.mxu0 %v557
    %733 = vmatprep.subr.bf16.mxu0 %v562
    %734 = vmatpush1.bf16.msra.mxu0 %v561
    %735 = vmatprep.subr.bf16.mxu0 %v566
    %736 = vmatpush1.bf16.msra.mxu0 %v565
    %737 = vmatprep.subr.bf16.mxu0 %v570
    %738 = vmatpush1.bf16.msra.mxu0 %v569
    %739 = vmatprep.subr.bf16.mxu0 0
    %740 = vmatpush1.bf16.msra.mxu0 0
    %741 = vmatprep.subr.bf16.mxu0 0
    %742 = vmatpush1.bf16.msra.mxu0 0
    %743 = vmatprep.subr.bf16.mxu0 0
    %744 = vmatpush1.bf16.msra.mxu0 0
    %745 = vmatprep.subr.bf16.mxu0 0
    %746 = vmatpush1.bf16.msra.mxu0 0
    %747 = vmatprep.subr.bf16.mxu0 0
    %748 = vmatpush1.bf16.msra.mxu0 0
    %749 = vmatprep.subr.bf16.mxu0 0
    %750 = vmatpush1.bf16.msra.mxu0 0
    %751 = vmatprep.subr.bf16.mxu0 0
    %752 = vmatpush1.bf16.msra.mxu0 0
    %753 = vmatprep.subr.bf16.mxu0 0
    %754 = vmatpush1.bf16.msra.mxu0 0
    %755 = vmatprep.mubr.bf16.mxu0 0
    %756 = vmatmul.mubr.bf16.gmra.mrb[0].mxu0 %v722
    %v757 = vpop.f32.mrb[0].mxu0
    %v758 = vadd.f32 0.0, %v757
    %v759 = vpop.f32.mrb[0].mxu0
    %v760 = vadd.f32 0.0, %v759
    %v761 = vpop.f32.mrb[0].mxu0
    %v762 = vpop.f32.mrb[0].mxu0
    %763 = vdwg.mxu0
    %764 = vmatprep.subr.bf16.mxu0 %v544
    %765 = vmatpush1.bf16.msra.mxu0 %v543
    %766 = vmatprep.subr.bf16.mxu0 %v548
    %767 = vmatpush1.bf16.msra.mxu0 %v547
    %768 = vmatprep.subr.bf16.mxu0 %v552
    %769 = vmatpush1.bf16.msra.mxu0 %v551
    %770 = vmatprep.subr.bf16.mxu0 %v556
    %771 = vmatpush1.bf16.msra.mxu0 %v555
    %772 = vmatprep.subr.bf16.mxu0 %v560
    %773 = vmatpush1.bf16.msra.mxu0 %v559
    %774 = vmatprep.subr.bf16.mxu0 %v564
    %775 = vmatpush1.bf16.msra.mxu0 %v563
    %776 = vmatprep.subr.bf16.mxu0 %v568
    %777 = vmatpush1.bf16.msra.mxu0 %v567
    %778 = vmatprep.subr.bf16.mxu0 %v572
    %779 = vmatpush1.bf16.msra.mxu0 %v571
    %780 = vmatprep.subr.bf16.mxu0 0
    %781 = vmatpush1.bf16.msra.mxu0 0
    %782 = vmatprep.subr.bf16.mxu0 0
    %783 = vmatpush1.bf16.msra.mxu0 0
    %784 = vmatprep.subr.bf16.mxu0 0
    %785 = vmatpush1.bf16.msra.mxu0 0
    %786 = vmatprep.subr.bf16.mxu0 0
    %787 = vmatpush1.bf16.msra.mxu0 0
    %788 = vmatprep.subr.bf16.mxu0 0
    %789 = vmatpush1.bf16.msra.mxu0 0
    %790 = vmatprep.subr.bf16.mxu0 0
    %791 = vmatpush1.bf16.msra.mxu0 0
    %792 = vmatprep.subr.bf16.mxu0 0
    %793 = vmatpush1.bf16.msra.mxu0 0
    %794 = vmatprep.subr.bf16.mxu0 0
    %795 = vmatpush1.bf16.msra.mxu0 0
    %796 = vmatprep.mubr.bf16.mxu0 0
    %797 = vmatmul.mubr.bf16.gmra.mrb[0].mxu0 %v722
    %v798 = vpop.f32.mrb[0].mxu0
    %v799 = vadd.f32 0.0, %v798
    %v800 = vpop.f32.mrb[0].mxu0
    %v801 = vadd.f32 0.0, %v800
    %v802 = vpop.f32.mrb[0].mxu0
    %v803 = vpop.f32.mrb[0].mxu0
    %804 = vdwg.mxu0
    %v805 = vadd.f32 %v718, %v758
    %v806 = vadd.f32 %v719, %v760
    %v807 = vadd.f32 %v720, %v799
    %v808 = vadd.f32 %v721, %v801
    %v809 = vxor.u32 %v805, 2147483648
    %v810 = vmul.f32 %v809, 1.442695
    %v811 = vpow.pop %v810
    %v812 = vadd.f32 %v811, 1.0
    %v813 = vrcp.pop %v812
    %v814 = vmul.f32 1.0, %v813
    %v815 = vxor.u32 %v806, 2147483648
    %v816 = vmul.f32 %v815, 1.442695
    %v817 = vpow.pop %v816
    %v818 = vadd.f32 %v817, 1.0
    %v819 = vrcp.pop %v818
    %v820 = vmul.f32 1.0, %v819
    %v821 = vtanh.pop %v807
    %v822 = vxor.u32 %v808, 2147483648
    %v823 = vmul.f32 %v822, 1.442695
    %v824 = vpow.pop %v823
    %v825 = vadd.f32 %v824, 1.0
    %v826 = vrcp.pop %v825
    %v827 = vmul.f32 1.0, %v826
    %v828 = vmul.f32 %v820, %v712
    %v829 = vmul.f32 %v814, %v821
    %v830 = vadd.f32 %v828, %v829
    %v831 = vtanh.pop %v830
    %v832 = vmul.f32 %v827, %v831
    %s833 = smul.u32 2, 4
    %s834 = smul.addr %s833, 8
    %s835 = scalar_lea.vmem [#allocation3], %s834
    %v836 = vld [vmem:[%s835] sm:$0xff]
    %v837 = vld [vmem:[%s835 + $0x8] sm:$0xff]
    %v838 = vld [vmem:[%s835 + $0x10] sm:$0xff]
    %v839 = vld [vmem:[%s835 + $0x18] sm:$0xff]
    %v840 = vpack.c.bf16 %v832, %v832
    %841 = vmatprep.subr.bf16.mxu0 %v542
    %842 = vmatpush1.bf16.msra.mxu0 %v541
    %843 = vmatprep.subr.bf16.mxu0 %v546
    %844 = vmatpush1.bf16.msra.mxu0 %v545
    %845 = vmatprep.subr.bf16.mxu0 %v550
    %846 = vmatpush1.bf16.msra.mxu0 %v549
    %847 = vmatprep.subr.bf16.mxu0 %v554
    %848 = vmatpush1.bf16.msra.mxu0 %v553
    %849 = vmatprep.subr.bf16.mxu0 %v558
    %850 = vmatpush1.bf16.msra.mxu0 %v557
    %851 = vmatprep.subr.bf16.mxu0 %v562
    %852 = vmatpush1.bf16.msra.mxu0 %v561
    %853 = vmatprep.subr.bf16.mxu0 %v566
    %854 = vmatpush1.bf16.msra.mxu0 %v565
    %855 = vmatprep.subr.bf16.mxu0 %v570
    %856 = vmatpush1.bf16.msra.mxu0 %v569
    %857 = vmatprep.subr.bf16.mxu0 0
    %858 = vmatpush1.bf16.msra.mxu0 0
    %859 = vmatprep.subr.bf16.mxu0 0
    %860 = vmatpush1.bf16.msra.mxu0 0
    %861 = vmatprep.subr.bf16.mxu0 0
    %862 = vmatpush1.bf16.msra.mxu0 0
    %863 = vmatprep.subr.bf16.mxu0 0
    %864 = vmatpush1.bf16.msra.mxu0 0
    %865 = vmatprep.subr.bf16.mxu0 0
    %866 = vmatpush1.bf16.msra.mxu0 0
    %867 = vmatprep.subr.bf16.mxu0 0
    %868 = vmatpush1.bf16.msra.mxu0 0
    %869 = vmatprep.subr.bf16.mxu0 0
    %870 = vmatpush1.bf16.msra.mxu0 0
    %871 = vmatprep.subr.bf16.mxu0 0
    %872 = vmatpush1.bf16.msra.mxu0 0
    %873 = vmatprep.mubr.bf16.mxu0 0
    %874 = vmatmul.mubr.bf16.gmra.mrb[0].mxu0 %v840
    %v875 = vpop.f32.mrb[0].mxu0
    %v876 = vadd.f32 0.0, %v875
    %v877 = vpop.f32.mrb[0].mxu0
    %v878 = vadd.f32 0.0, %v877
    %v879 = vpop.f32.mrb[0].mxu0
    %v880 = vpop.f32.mrb[0].mxu0
    %881 = vdwg.mxu0
    %882 = vmatprep.subr.bf16.mxu0 %v544
    %883 = vmatpush1.bf16.msra.mxu0 %v543
    %884 = vmatprep.subr.bf16.mxu0 %v548
    %885 = vmatpush1.bf16.msra.mxu0 %v547
    %886 = vmatprep.subr.bf16.mxu0 %v552
    %887 = vmatpush1.bf16.msra.mxu0 %v551
    %888 = vmatprep.subr.bf16.mxu0 %v556
    %889 = vmatpush1.bf16.msra.mxu0 %v555
    %890 = vmatprep.subr.bf16.mxu0 %v560
    %891 = vmatpush1.bf16.msra.mxu0 %v559
    %892 = vmatprep.subr.bf16.mxu0 %v564
    %893 = vmatpush1.bf16.msra.mxu0 %v563
    %894 = vmatprep.subr.bf16.mxu0 %v568
    %895 = vmatpush1.bf16.msra.mxu0 %v567
    %896 = vmatprep.subr.bf16.mxu0 %v572
    %897 = vmatpush1.bf16.msra.mxu0 %v571
    %898 = vmatprep.subr.bf16.mxu0 0
    %899 = vmatpush1.bf16.msra.mxu0 0
    %900 = vmatprep.subr.bf16.mxu0 0
    %901 = vmatpush1.bf16.msra.mxu0 0
    %902 = vmatprep.subr.bf16.mxu0 0
    %903 = vmatpush1.bf16.msra.mxu0 0
    %904 = vmatprep.subr.bf16.mxu0 0
    %905 = vmatpush1.bf16.msra.mxu0 0
    %906 = vmatprep.subr.bf16.mxu0 0
    %907 = vmatpush1.bf16.msra.mxu0 0
    %908 = vmatprep.subr.bf16.mxu0 0
    %909 = vmatpush1.bf16.msra.mxu0 0
    %910 = vmatprep.subr.bf16.mxu0 0
    %911 = vmatpush1.bf16.msra.mxu0 0
    %912 = vmatprep.subr.bf16.mxu0 0
    %913 = vmatpush1.bf16.msra.mxu0 0
    %914 = vmatprep.mubr.bf16.mxu0 0
    %915 = vmatmul.mubr.bf16.gmra.mrb[0].mxu0 %v840
    %v916 = vpop.f32.mrb[0].mxu0
    %v917 = vadd.f32 0.0, %v916
    %v918 = vpop.f32.mrb[0].mxu0
    %v919 = vadd.f32 0.0, %v918
    %v920 = vpop.f32.mrb[0].mxu0
    %v921 = vpop.f32.mrb[0].mxu0
    %922 = vdwg.mxu0
    %v923 = vadd.f32 %v836, %v876
    %v924 = vadd.f32 %v837, %v878
    %v925 = vadd.f32 %v838, %v917
    %v926 = vadd.f32 %v839, %v919
    %v927 = vxor.u32 %v923, 2147483648
    %v928 = vmul.f32 %v927, 1.442695
    %v929 = vpow.pop %v928
    %v930 = vadd.f32 %v929, 1.0
    %v931 = vrcp.pop %v930
    %v932 = vmul.f32 1.0, %v931
    %v933 = vxor.u32 %v924, 2147483648
    %v934 = vmul.f32 %v933, 1.442695
    %v935 = vpow.pop %v934
    %v936 = vadd.f32 %v935, 1.0
    %v937 = vrcp.pop %v936
    %v938 = vmul.f32 1.0, %v937
    %v939 = vtanh.pop %v925
    %v940 = vxor.u32 %v926, 2147483648
    %v941 = vmul.f32 %v940, 1.442695
    %v942 = vpow.pop %v941
    %v943 = vadd.f32 %v942, 1.0
    %v944 = vrcp.pop %v943
    %v945 = vmul.f32 1.0, %v944
    %v946 = vmul.f32 %v938, %v830
    %v947 = vmul.f32 %v932, %v939
    %v948 = vadd.f32 %v946, %v947
    %v949 = vtanh.pop %v948
    %v950 = vmul.f32 %v945, %v949
    %s951 = smul.u32 3, 4
    %s952 = smul.addr %s951, 8
    %s953 = scalar_lea.vmem [#allocation3], %s952
    %v954 = vld [vmem:[%s953] sm:$0xff]
    %v955 = vld [vmem:[%s953 + $0x8] sm:$0xff]
    %v956 = vld [vmem:[%s953 + $0x10] sm:$0xff]
    %v957 = vld [vmem:[%s953 + $0x18] sm:$0xff]
    %v958 = vpack.c.bf16 %v950, %v950
    %959 = vmatprep.subr.bf16.mxu0 %v542
    %960 = vmatpush1.bf16.msra.mxu0 %v541
    %961 = vmatprep.subr.bf16.mxu0 %v546
    %962 = vmatpush1.bf16.msra.mxu0 %v545
    %963 = vmatprep.subr.bf16.mxu0 %v550
    %964 = vmatpush1.bf16.msra.mxu0 %v549
    %965 = vmatprep.subr.bf16.mxu0 %v554
    %966 = vmatpush1.bf16.msra.mxu0 %v553
    %967 = vmatprep.subr.bf16.mxu0 %v558
    %968 = vmatpush1.bf16.msra.mxu0 %v557
    %969 = vmatprep.subr.bf16.mxu0 %v562
    %970 = vmatpush1.bf16.msra.mxu0 %v561
    %971 = vmatprep.subr.bf16.mxu0 %v566
    %972 = vmatpush1.bf16.msra.mxu0 %v565
    %973 = vmatprep.subr.bf16.mxu0 %v570
    %974 = vmatpush1.bf16.msra.mxu0 %v569
    %975 = vmatprep.subr.bf16.mxu0 0
    %976 = vmatpush1.bf16.msra.mxu0 0
    %977 = vmatprep.subr.bf16.mxu0 0
    %978 = vmatpush1.bf16.msra.mxu0 0
    %979 = vmatprep.subr.bf16.mxu0 0
    %980 = vmatpush1.bf16.msra.mxu0 0
    %981 = vmatprep.subr.bf16.mxu0 0
    %982 = vmatpush1.bf16.msra.mxu0 0
    %983 = vmatprep.subr.bf16.mxu0 0
    %984 = vmatpush1.bf16.msra.mxu0 0
    %985 = vmatprep.subr.bf16.mxu0 0
    %986 = vmatpush1.bf16.msra.mxu0 0
    %987 = vmatprep.subr.bf16.mxu0 0
    %988 = vmatpush1.bf16.msra.mxu0 0
    %989 = vmatprep.subr.bf16.mxu0 0
    %990 = vmatpush1.bf16.msra.mxu0 0
    %991 = vmatprep.mubr.bf16.mxu0 0
    %992 = vmatmul.mubr.bf16.gmra.mrb[0].mxu0 %v958
    %v993 = vpop.f32.mrb[0].mxu0
    %v994 = vadd.f32 0.0, %v993
    %v995 = vpop.f32.mrb[0].mxu0
    %v996 = vadd.f32 0.0, %v995
    %v997 = vpop.f32.mrb[0].mxu0
    %v998 = vpop.f32.mrb[0].mxu0
    %999 = vdwg.mxu0
    %1000 = vmatprep.subr.bf16.mxu0 %v544
    %1001 = vmatpush1.bf16.msra.mxu0 %v543
    %1002 = vmatprep.subr.bf16.mxu0 %v548
    %1003 = vmatpush1.bf16.msra.mxu0 %v547
    %1004 = vmatprep.subr.bf16.mxu0 %v552
    %1005 = vmatpush1.bf16.msra.mxu0 %v551
    %1006 = vmatprep.subr.bf16.mxu0 %v556
    %1007 = vmatpush1.bf16.msra.mxu0 %v555
    %1008 = vmatprep.subr.bf16.mxu0 %v560
    %1009 = vmatpush1.bf16.msra.mxu0 %v559
    %1010 = vmatprep.subr.bf16.mxu0 %v564
    %1011 = vmatpush1.bf16.msra.mxu0 %v563
    %1012 = vmatprep.subr.bf16.mxu0 %v568
    %1013 = vmatpush1.bf16.msra.mxu0 %v567
    %1014 = vmatprep.subr.bf16.mxu0 %v572
    %1015 = vmatpush1.bf16.msra.mxu0 %v571
    %1016 = vmatprep.subr.bf16.mxu0 0
    %1017 = vmatpush1.bf16.msra.mxu0 0
    %1018 = vmatprep.subr.bf16.mxu0 0
    %1019 = vmatpush1.bf16.msra.mxu0 0
    %1020 = vmatprep.subr.bf16.mxu0 0
    %1021 = vmatpush1.bf16.msra.mxu0 0
    %1022 = vmatprep.subr.bf16.mxu0 0
    %1023 = vmatpush1.bf16.msra.mxu0 0
    %1024 = vmatprep.subr.bf16.mxu0 0
    %1025 = vmatpush1.bf16.msra.mxu0 0
    %1026 = vmatprep.subr.bf16.mxu0 0
    %1027 = vmatpush1.bf16.msra.mxu0 0
    %1028 = vmatprep.subr.bf16.mxu0 0
    %1029 = vmatpush1.bf16.msra.mxu0 0
    %1030 = vmatprep.subr.bf16.mxu0 0
    %1031 = vmatpush1.bf16.msra.mxu0 0
    %1032 = vmatprep.mubr.bf16.mxu0 0
    %1033 = vmatmul.mubr.bf16.gmra.mrb[0].mxu0 %v958
    %v1034 = vpop.f32.mrb[0].mxu0
    %v1035 = vadd.f32 0.0, %v1034
    %v1036 = vpop.f32.mrb[0].mxu0
    %v1037 = vadd.f32 0.0, %v1036
    %v1038 = vpop.f32.mrb[0].mxu0
    %v1039 = vpop.f32.mrb[0].mxu0
    %1040 = vdwg.mxu0
    %v1041 = vadd.f32 %v954, %v994
    %v1042 = vadd.f32 %v955, %v996
    %v1043 = vadd.f32 %v956, %v1035
    %v1044 = vadd.f32 %v957, %v1037
    %v1045 = vxor.u32 %v1041, 2147483648
    %v1046 = vmul.f32 %v1045, 1.442695
    %v1047 = vpow.pop %v1046
    %v1048 = vadd.f32 %v1047, 1.0
    %v1049 = vrcp.pop %v1048
    %v1050 = vmul.f32 1.0, %v1049
    %v1051 = vxor.u32 %v1042, 2147483648
    %v1052 = vmul.f32 %v1051, 1.442695
    %v1053 = vpow.pop %v1052
    %v1054 = vadd.f32 %v1053, 1.0
    %v1055 = vrcp.pop %v1054
    %v1056 = vmul.f32 1.0, %v1055
    %v1057 = vtanh.pop %v1043
    %v1058 = vxor.u32 %v1044, 2147483648
    %v1059 = vmul.f32 %v1058, 1.442695
    %v1060 = vpow.pop %v1059
    %v1061 = vadd.f32 %v1060, 1.0
    %v1062 = vrcp.pop %v1061
    %v1063 = vmul.f32 1.0, %v1062
    %v1064 = vmul.f32 %v1056, %v948
    %v1065 = vmul.f32 %v1050, %v1057
    %v1066 = vadd.f32 %v1064, %v1065
    %v1067 = vtanh.pop %v1066
    %v1068 = vmul.f32 %v1063, %v1067
    %s1069 = smul.u32 4, 4
    %s1070 = smul.addr %s1069, 8
    %s1071 = scalar_lea.vmem [#allocation3], %s1070
    %v1072 = vld [vmem:[%s1071] sm:$0xff]
    %v1073 = vld [vmem:[%s1071 + $0x8] sm:$0xff]
    %v1074 = vld [vmem:[%s1071 + $0x10] sm:$0xff]
    %v1075 = vld [vmem:[%s1071 + $0x18] sm:$0xff]
    %v1076 = vpack.c.bf16 %v1068, %v1068
    %1077 = vmatprep.subr.bf16.mxu0 %v542
    %1078 = vmatpush1.bf16.msra.mxu0 %v541
    %1079 = vmatprep.subr.bf16.mxu0 %v546
    %1080 = vmatpush1.bf16.msra.mxu0 %v545
    %1081 = vmatprep.subr.bf16.mxu0 %v550
    %1082 = vmatpush1.bf16.msra.mxu0 %v549
    %1083 = vmatprep.subr.bf16.mxu0 %v554
    %1084 = vmatpush1.bf16.msra.mxu0 %v553
    %1085 = vmatprep.subr.bf16.mxu0 %v558
    %1086 = vmatpush1.bf16.msra.mxu0 %v557
    %1087 = vmatprep.subr.bf16.mxu0 %v562
    %1088 = vmatpush1.bf16.msra.mxu0 %v561
    %1089 = vmatprep.subr.bf16.mxu0 %v566
    %1090 = vmatpush1.bf16.msra.mxu0 %v565
    %1091 = vmatprep.subr.bf16.mxu0 %v570
    %1092 = vmatpush1.bf16.msra.mxu0 %v569
    %1093 = vmatprep.subr.bf16.mxu0 0
    %1094 = vmatpush1.bf16.msra.mxu0 0
    %1095 = vmatprep.subr.bf16.mxu0 0
    %1096 = vmatpush1.bf16.msra.mxu0 0
    %1097 = vmatprep.subr.bf16.mxu0 0
    %1098 = vmatpush1.bf16.msra.mxu0 0
    %1099 = vmatprep.subr.bf16.mxu0 0
    %1100 = vmatpush1.bf16.msra.mxu0 0
    %1101 = vmatprep.subr.bf16.mxu0 0
    %1102 = vmatpush1.bf16.msra.mxu0 0
    %1103 = vmatprep.subr.bf16.mxu0 0
    %1104 = vmatpush1.bf16.msra.mxu0 0
    %1105 = vmatprep.subr.bf16.mxu0 0
    %1106 = vmatpush1.bf16.msra.mxu0 0
    %1107 = vmatprep.subr.bf16.mxu0 0
    %1108 = vmatpush1.bf16.msra.mxu0 0
    %1109 = vmatprep.mubr.bf16.mxu0 0
    %1110 = vmatmul.mubr.bf16.gmra.mrb[0].mxu0 %v1076
    %v1111 = vpop.f32.mrb[0].mxu0
    %v1112 = vadd.f32 0.0, %v1111
    %v1113 = vpop.f32.mrb[0].mxu0
    %v1114 = vadd.f32 0.0, %v1113
    %v1115 = vpop.f32.mrb[0].mxu0
    %v1116 = vpop.f32.mrb[0].mxu0
    %1117 = vdwg.mxu0
    %1118 = vmatprep.subr.bf16.mxu0 %v544
    %1119 = vmatpush1.bf16.msra.mxu0 %v543
    %1120 = vmatprep.subr.bf16.mxu0 %v548
    %1121 = vmatpush1.bf16.msra.mxu0 %v547
    %1122 = vmatprep.subr.bf16.mxu0 %v552
    %1123 = vmatpush1.bf16.msra.mxu0 %v551
    %1124 = vmatprep.subr.bf16.mxu0 %v556
    %1125 = vmatpush1.bf16.msra.mxu0 %v555
    %1126 = vmatprep.subr.bf16.mxu0 %v560
    %1127 = vmatpush1.bf16.msra.mxu0 %v559
    %1128 = vmatprep.subr.bf16.mxu0 %v564
    %1129 = vmatpush1.bf16.msra.mxu0 %v563
    %1130 = vmatprep.subr.bf16.mxu0 %v568
    %1131 = vmatpush1.bf16.msra.mxu0 %v567
    %1132 = vmatprep.subr.bf16.mxu0 %v572
    %1133 = vmatpush1.bf16.msra.mxu0 %v571
    %1134 = vmatprep.subr.bf16.mxu0 0
    %1135 = vmatpush1.bf16.msra.mxu0 0
    %1136 = vmatprep.subr.bf16.mxu0 0
    %1137 = vmatpush1.bf16.msra.mxu0 0
    %1138 = vmatprep.subr.bf16.mxu0 0
    %1139 = vmatpush1.bf16.msra.mxu0 0
    %1140 = vmatprep.subr.bf16.mxu0 0
    %1141 = vmatpush1.bf16.msra.mxu0 0
    %1142 = vmatprep.subr.bf16.mxu0 0
    %1143 = vmatpush1.bf16.msra.mxu0 0
    %1144 = vmatprep.subr.bf16.mxu0 0
    %1145 = vmatpush1.bf16.msra.mxu0 0
    %1146 = vmatprep.subr.bf16.mxu0 0
    %1147 = vmatpush1.bf16.msra.mxu0 0
    %1148 = vmatprep.subr.bf16.mxu0 0
    %1149 = vmatpush1.bf16.msra.mxu0 0
    %1150 = vmatprep.mubr.bf16.mxu0 0
    %1151 = vmatmul.mubr.bf16.gmra.mrb[0].mxu0 %v1076
    %v1152 = vpop.f32.mrb[0].mxu0
    %v1153 = vadd.f32 0.0, %v1152
    %v1154 = vpop.f32.mrb[0].mxu0
    %v1155 = vadd.f32 0.0, %v1154
    %v1156 = vpop.f32.mrb[0].mxu0
    %v1157 = vpop.f32.mrb[0].mxu0
    %1158 = vdwg.mxu0
    %v1159 = vadd.f32 %v1072, %v1112
    %v1160 = vadd.f32 %v1073, %v1114
    %v1161 = vadd.f32 %v1074, %v1153
    %v1162 = vadd.f32 %v1075, %v1155
    %v1163 = vxor.u32 %v1159, 2147483648
    %v1164 = vmul.f32 %v1163, 1.442695
    %v1165 = vpow.pop %v1164
    %v1166 = vadd.f32 %v1165, 1.0
    %v1167 = vrcp.pop %v1166
    %v1168 = vmul.f32 1.0, %v1167
    %v1169 = vxor.u32 %v1160, 2147483648
    %v1170 = vmul.f32 %v1169, 1.442695
    %v1171 = vpow.pop %v1170
    %v1172 = vadd.f32 %v1171, 1.0
    %v1173 = vrcp.pop %v1172
    %v1174 = vmul.f32 1.0, %v1173
    %v1175 = vtanh.pop %v1161
    %v1176 = vxor.u32 %v1162, 2147483648
    %v1177 = vmul.f32 %v1176, 1.442695
    %v1178 = vpow.pop %v1177
    %v1179 = vadd.f32 %v1178, 1.0
    %v1180 = vrcp.pop %v1179
    %v1181 = vmul.f32 1.0, %v1180
    %v1182 = vmul.f32 %v1174, %v1066
    %v1183 = vmul.f32 %v1168, %v1175
    %v1184 = vadd.f32 %v1182, %v1183
    %v1185 = vtanh.pop %v1184
    %v1186 = vmul.f32 %v1181, %v1185
    %s1187 = smul.u32 5, 4
    %s1188 = smul.addr %s1187, 8
    %s1189 = scalar_lea.vmem [#allocation3], %s1188
    %v1190 = vld [vmem:[%s1189] sm:$0xff]
    %v1191 = vld [vmem:[%s1189 + $0x8] sm:$0xff]
    %v1192 = vld [vmem:[%s1189 + $0x10] sm:$0xff]
    %v1193 = vld [vmem:[%s1189 + $0x18] sm:$0xff]
    %v1194 = vpack.c.bf16 %v1186, %v1186
    %1195 = vmatprep.subr.bf16.mxu0 %v542
    %1196 = vmatpush1.bf16.msra.mxu0 %v541
    %1197 = vmatprep.subr.bf16.mxu0 %v546
    %1198 = vmatpush1.bf16.msra.mxu0 %v545
    %1199 = vmatprep.subr.bf16.mxu0 %v550
    %1200 = vmatpush1.bf16.msra.mxu0 %v549
    %1201 = vmatprep.subr.bf16.mxu0 %v554
    %1202 = vmatpush1.bf16.msra.mxu0 %v553
    %1203 = vmatprep.subr.bf16.mxu0 %v558
    %1204 = vmatpush1.bf16.msra.mxu0 %v557
    %1205 = vmatprep.subr.bf16.mxu0 %v562
    %1206 = vmatpush1.bf16.msra.mxu0 %v561
    %1207 = vmatprep.subr.bf16.mxu0 %v566
    %1208 = vmatpush1.bf16.msra.mxu0 %v565
    %1209 = vmatprep.subr.bf16.mxu0 %v570
    %1210 = vmatpush1.bf16.msra.mxu0 %v569
    %1211 = vmatprep.subr.bf16.mxu0 0
    %1212 = vmatpush1.bf16.msra.mxu0 0
    %1213 = vmatprep.subr.bf16.mxu0 0
    %1214 = vmatpush1.bf16.msra.mxu0 0
    %1215 = vmatprep.subr.bf16.mxu0 0
    %1216 = vmatpush1.bf16.msra.mxu0 0
    %1217 = vmatprep.subr.bf16.mxu0 0
    %1218 = vmatpush1.bf16.msra.mxu0 0
    %1219 = vmatprep.subr.bf16.mxu0 0
    %1220 = vmatpush1.bf16.msra.mxu0 0
    %1221 = vmatprep.subr.bf16.mxu0 0
    %1222 = vmatpush1.bf16.msra.mxu0 0
    %1223 = vmatprep.subr.bf16.mxu0 0
    %1224 = vmatpush1.bf16.msra.mxu0 0
    %1225 = vmatprep.subr.bf16.mxu0 0
    %1226 = vmatpush1.bf16.msra.mxu0 0
    %1227 = vmatprep.mubr.bf16.mxu0 0
    %1228 = vmatmul.mubr.bf16.gmra.mrb[0].mxu0 %v1194
    %v1229 = vpop.f32.mrb[0].mxu0
    %v1230 = vadd.f32 0.0, %v1229
    %v1231 = vpop.f32.mrb[0].mxu0
    %v1232 = vadd.f32 0.0, %v1231
    %v1233 = vpop.f32.mrb[0].mxu0
    %v1234 = vpop.f32.mrb[0].mxu0
    %1235 = vdwg.mxu0
    %1236 = vmatprep.subr.bf16.mxu0 %v544
    %1237 = vmatpush1.bf16.msra.mxu0 %v543
    %1238 = vmatprep.subr.bf16.mxu0 %v548
    %1239 = vmatpush1.bf16.msra.mxu0 %v547
    %1240 = vmatprep.subr.bf16.mxu0 %v552
    %1241 = vmatpush1.bf16.msra.mxu0 %v551
    %1242 = vmatprep.subr.bf16.mxu0 %v556
    %1243 = vmatpush1.bf16.msra.mxu0 %v555
    %1244 = vmatprep.subr.bf16.mxu0 %v560
    %1245 = vmatpush1.bf16.msra.mxu0 %v559
    %1246 = vmatprep.subr.bf16.mxu0 %v564
    %1247 = vmatpush1.bf16.msra.mxu0 %v563
    %1248 = vmatprep.subr.bf16.mxu0 %v568
    %1249 = vmatpush1.bf16.msra.mxu0 %v567
    %1250 = vmatprep.subr.bf16.mxu0 %v572
    %1251 = vmatpush1.bf16.msra.mxu0 %v571
    %1252 = vmatprep.subr.bf16.mxu0 0
    %1253 = vmatpush1.bf16.msra.mxu0 0
    %1254 = vmatprep.subr.bf16.mxu0 0
    %1255 = vmatpush1.bf16.msra.mxu0 0
    %1256 = vmatprep.subr.bf16.mxu0 0
    %1257 = vmatpush1.bf16.msra.mxu0 0
    %1258 = vmatprep.subr.bf16.mxu0 0
    %1259 = vmatpush1.bf16.msra.mxu0 0
    %1260 = vmatprep.subr.bf16.mxu0 0
    %1261 = vmatpush1.bf16.msra.mxu0 0
    %1262 = vmatprep.subr.bf16.mxu0 0
    %1263 = vmatpush1.bf16.msra.mxu0 0
    %1264 = vmatprep.subr.bf16.mxu0 0
    %1265 = vmatpush1.bf16.msra.mxu0 0
    %1266 = vmatprep.subr.bf16.mxu0 0
    %1267 = vmatpush1.bf16.msra.mxu0 0
    %1268 = vmatprep.mubr.bf16.mxu0 0
    %1269 = vmatmul.mubr.bf16.gmra.mrb[0].mxu0 %v1194
    %v1270 = vpop.f32.mrb[0].mxu0
    %v1271 = vadd.f32 0.0, %v1270
    %v1272 = vpop.f32.mrb[0].mxu0
    %v1273 = vadd.f32 0.0, %v1272
    %v1274 = vpop.f32.mrb[0].mxu0
    %v1275 = vpop.f32.mrb[0].mxu0
    %1276 = vdwg.mxu0
    %v1277 = vadd.f32 %v1190, %v1230
    %v1278 = vadd.f32 %v1191, %v1232
    %v1279 = vadd.f32 %v1192, %v1271
    %v1280 = vadd.f32 %v1193, %v1273
    %v1281 = vxor.u32 %v1277, 2147483648
    %v1282 = vmul.f32 %v1281, 1.442695
    %v1283 = vpow.pop %v1282
    %v1284 = vadd.f32 %v1283, 1.0
    %v1285 = vrcp.pop %v1284
    %v1286 = vmul.f32 1.0, %v1285
    %v1287 = vxor.u32 %v1278, 2147483648
    %v1288 = vmul.f32 %v1287, 1.442695
    %v1289 = vpow.pop %v1288
    %v1290 = vadd.f32 %v1289, 1.0
    %v1291 = vrcp.pop %v1290
    %v1292 = vmul.f32 1.0, %v1291
    %v1293 = vtanh.pop %v1279
    %v1294 = vxor.u32 %v1280, 2147483648
    %v1295 = vmul.f32 %v1294, 1.442695
    %v1296 = vpow.pop %v1295
    %v1297 = vadd.f32 %v1296, 1.0
    %v1298 = vrcp.pop %v1297
    %v1299 = vmul.f32 1.0, %v1298
    %v1300 = vmul.f32 %v1292, %v1184
    %v1301 = vmul.f32 %v1286, %v1293
    %v1302 = vadd.f32 %v1300, %v1301
    %v1303 = vtanh.pop %v1302
    %v1304 = vmul.f32 %v1299, %v1303
    %s1305 = smul.u32 6, 4
    %s1306 = smul.addr %s1305, 8
    %s1307 = scalar_lea.vmem [#allocation3], %s1306
    %v1308 = vld [vmem:[%s1307] sm:$0xff]
    %v1309 = vld [vmem:[%s1307 + $0x8] sm:$0xff]
    %v1310 = vld [vmem:[%s1307 + $0x10] sm:$0xff]
    %v1311 = vld [vmem:[%s1307 + $0x18] sm:$0xff]
    %v1312 = vpack.c.bf16 %v1304, %v1304
    %1313 = vmatprep.subr.bf16.mxu0 %v542
    %1314 = vmatpush1.bf16.msra.mxu0 %v541
    %1315 = vmatprep.subr.bf16.mxu0 %v546
    %1316 = vmatpush1.bf16.msra.mxu0 %v545
    %1317 = vmatprep.subr.bf16.mxu0 %v550
    %1318 = vmatpush1.bf16.msra.mxu0 %v549
    %1319 = vmatprep.subr.bf16.mxu0 %v554
    %1320 = vmatpush1.bf16.msra.mxu0 %v553
    %1321 = vmatprep.subr.bf16.mxu0 %v558
    %1322 = vmatpush1.bf16.msra.mxu0 %v557
    %1323 = vmatprep.subr.bf16.mxu0 %v562
    %1324 = vmatpush1.bf16.msra.mxu0 %v561
    %1325 = vmatprep.subr.bf16.mxu0 %v566
    %1326 = vmatpush1.bf16.msra.mxu0 %v565
    %1327 = vmatprep.subr.bf16.mxu0 %v570
    %1328 = vmatpush1.bf16.msra.mxu0 %v569
    %1329 = vmatprep.subr.bf16.mxu0 0
    %1330 = vmatpush1.bf16.msra.mxu0 0
    %1331 = vmatprep.subr.bf16.mxu0 0
    %1332 = vmatpush1.bf16.msra.mxu0 0
    %1333 = vmatprep.subr.bf16.mxu0 0
    %1334 = vmatpush1.bf16.msra.mxu0 0
    %1335 = vmatprep.subr.bf16.mxu0 0
    %1336 = vmatpush1.bf16.msra.mxu0 0
    %1337 = vmatprep.subr.bf16.mxu0 0
    %1338 = vmatpush1.bf16.msra.mxu0 0
    %1339 = vmatprep.subr.bf16.mxu0 0
    %1340 = vmatpush1.bf16.msra.mxu0 0
    %1341 = vmatprep.subr.bf16.mxu0 0
    %1342 = vmatpush1.bf16.msra.mxu0 0
    %1343 = vmatprep.subr.bf16.mxu0 0
    %1344 = vmatpush1.bf16.msra.mxu0 0
    %1345 = vmatprep.mubr.bf16.mxu0 0
    %1346 = vmatmul.mubr.bf16.gmra.mrb[0].mxu0 %v1312
    %v1347 = vpop.f32.mrb[0].mxu0
    %v1348 = vadd.f32 0.0, %v1347
    %v1349 = vpop.f32.mrb[0].mxu0
    %v1350 = vadd.f32 0.0, %v1349
    %v1351 = vpop.f32.mrb[0].mxu0
    %v1352 = vpop.f32.mrb[0].mxu0
    %1353 = vdwg.mxu0
    %1354 = vmatprep.subr.bf16.mxu0 %v544
    %1355 = vmatpush1.bf16.msra.mxu0 %v543
    %1356 = vmatprep.subr.bf16.mxu0 %v548
    %1357 = vmatpush1.bf16.msra.mxu0 %v547
    %1358 = vmatprep.subr.bf16.mxu0 %v552
    %1359 = vmatpush1.bf16.msra.mxu0 %v551
    %1360 = vmatprep.subr.bf16.mxu0 %v556
    %1361 = vmatpush1.bf16.msra.mxu0 %v555
    %1362 = vmatprep.subr.bf16.mxu0 %v560
    %1363 = vmatpush1.bf16.msra.mxu0 %v559
    %1364 = vmatprep.subr.bf16.mxu0 %v564
    %1365 = vmatpush1.bf16.msra.mxu0 %v563
    %1366 = vmatprep.subr.bf16.mxu0 %v568
    %1367 = vmatpush1.bf16.msra.mxu0 %v567
    %1368 = vmatprep.subr.bf16.mxu0 %v572
    %1369 = vmatpush1.bf16.msra.mxu0 %v571
    %1370 = vmatprep.subr.bf16.mxu0 0
    %1371 = vmatpush1.bf16.msra.mxu0 0
    %1372 = vmatprep.subr.bf16.mxu0 0
    %1373 = vmatpush1.bf16.msra.mxu0 0
    %1374 = vmatprep.subr.bf16.mxu0 0
    %1375 = vmatpush1.bf16.msra.mxu0 0
    %1376 = vmatprep.subr.bf16.mxu0 0
    %1377 = vmatpush1.bf16.msra.mxu0 0
    %1378 = vmatprep.subr.bf16.mxu0 0
    %1379 = vmatpush1.bf16.msra.mxu0 0
    %1380 = vmatprep.subr.bf16.mxu0 0
    %1381 = vmatpush1.bf16.msra.mxu0 0
    %1382 = vmatprep.subr.bf16.mxu0 0
    %1383 = vmatpush1.bf16.msra.mxu0 0
    %1384 = vmatprep.subr.bf16.mxu0 0
    %1385 = vmatpush1.bf16.msra.mxu0 0
    %1386 = vmatprep.mubr.bf16.mxu0 0
    %1387 = vmatmul.mubr.bf16.gmra.mrb[0].mxu0 %v1312
    %v1388 = vpop.f32.mrb[0].mxu0
    %v1389 = vadd.f32 0.0, %v1388
    %v1390 = vpop.f32.mrb[0].mxu0
    %v1391 = vadd.f32 0.0, %v1390
    %v1392 = vpop.f32.mrb[0].mxu0
    %v1393 = vpop.f32.mrb[0].mxu0
    %1394 = vdwg.mxu0
    %v1395 = vadd.f32 %v1308, %v1348
    %v1396 = vadd.f32 %v1309, %v1350
    %v1397 = vadd.f32 %v1310, %v1389
    %v1398 = vadd.f32 %v1311, %v1391
    %v1399 = vxor.u32 %v1395, 2147483648
    %v1400 = vmul.f32 %v1399, 1.442695
    %v1401 = vpow.pop %v1400
    %v1402 = vadd.f32 %v1401, 1.0
    %v1403 = vrcp.pop %v1402
    %v1404 = vmul.f32 1.0, %v1403
    %v1405 = vxor.u32 %v1396, 2147483648
    %v1406 = vmul.f32 %v1405, 1.442695
    %v1407 = vpow.pop %v1406
    %v1408 = vadd.f32 %v1407, 1.0
    %v1409 = vrcp.pop %v1408
    %v1410 = vmul.f32 1.0, %v1409
    %v1411 = vtanh.pop %v1397
    %v1412 = vxor.u32 %v1398, 2147483648
    %v1413 = vmul.f32 %v1412, 1.442695
    %v1414 = vpow.pop %v1413
    %v1415 = vadd.f32 %v1414, 1.0
    %v1416 = vrcp.pop %v1415
    %v1417 = vmul.f32 1.0, %v1416
    %v1418 = vmul.f32 %v1410, %v1302
    %v1419 = vmul.f32 %v1404, %v1411
    %v1420 = vadd.f32 %v1418, %v1419
    %v1421 = vtanh.pop %v1420
    %v1422 = vmul.f32 %v1417, %v1421
    %s1423 = smul.u32 7, 4
    %s1424 = smul.addr %s1423, 8
    %s1425 = scalar_lea.vmem [#allocation3], %s1424
    %v1426 = vld [vmem:[%s1425] sm:$0xff]
    %v1427 = vld [vmem:[%s1425 + $0x8] sm:$0xff]
    %v1428 = vld [vmem:[%s1425 + $0x10] sm:$0xff]
    %v1429 = vld [vmem:[%s1425 + $0x18] sm:$0xff]
    %v1430 = vpack.c.bf16 %v1422, %v1422
    %1431 = vmatprep.subr.bf16.mxu0 %v542
    %1432 = vmatpush1.bf16.msra.mxu0 %v541
    %1433 = vmatprep.subr.bf16.mxu0 %v546
    %1434 = vmatpush1.bf16.msra.mxu0 %v545
    %1435 = vmatprep.subr.bf16.mxu0 %v550
    %1436 = vmatpush1.bf16.msra.mxu0 %v549
    %1437 = vmatprep.subr.bf16.mxu0 %v554
    %1438 = vmatpush1.bf16.msra.mxu0 %v553
    %1439 = vmatprep.subr.bf16.mxu0 %v558
    %1440 = vmatpush1.bf16.msra.mxu0 %v557
    %1441 = vmatprep.subr.bf16.mxu0 %v562
    %1442 = vmatpush1.bf16.msra.mxu0 %v561
    %1443 = vmatprep.subr.bf16.mxu0 %v566
    %1444 = vmatpush1.bf16.msra.mxu0 %v565
    %1445 = vmatprep.subr.bf16.mxu0 %v570
    %1446 = vmatpush1.bf16.msra.mxu0 %v569
    %1447 = vmatprep.subr.bf16.mxu0 0
    %1448 = vmatpush1.bf16.msra.mxu0 0
    %1449 = vmatprep.subr.bf16.mxu0 0
    %1450 = vmatpush1.bf16.msra.mxu0 0
    %1451 = vmatprep.subr.bf16.mxu0 0
    %1452 = vmatpush1.bf16.msra.mxu0 0
    %1453 = vmatprep.subr.bf16.mxu0 0
    %1454 = vmatpush1.bf16.msra.mxu0 0
    %1455 = vmatprep.subr.bf16.mxu0 0
    %1456 = vmatpush1.bf16.msra.mxu0 0
    %1457 = vmatprep.subr.bf16.mxu0 0
    %1458 = vmatpush1.bf16.msra.mxu0 0
    %1459 = vmatprep.subr.bf16.mxu0 0
    %1460 = vmatpush1.bf16.msra.mxu0 0
    %1461 = vmatprep.subr.bf16.mxu0 0
    %1462 = vmatpush1.bf16.msra.mxu0 0
    %1463 = vmatprep.mubr.bf16.mxu0 0
    %1464 = vmatmul.mubr.bf16.gmra.mrb[0].mxu0 %v1430
    %v1465 = vpop.f32.mrb[0].mxu0
    %v1466 = vadd.f32 0.0, %v1465
    %v1467 = vpop.f32.mrb[0].mxu0
    %v1468 = vadd.f32 0.0, %v1467
    %v1469 = vpop.f32.mrb[0].mxu0
    %v1470 = vpop.f32.mrb[0].mxu0
    %1471 = vdwg.mxu0
    %1472 = vmatprep.subr.bf16.mxu0 %v544
    %1473 = vmatpush1.bf16.msra.mxu0 %v543
    %1474 = vmatprep.subr.bf16.mxu0 %v548
    %1475 = vmatpush1.bf16.msra.mxu0 %v547
    %1476 = vmatprep.subr.bf16.mxu0 %v552
    %1477 = vmatpush1.bf16.msra.mxu0 %v551
    %1478 = vmatprep.subr.bf16.mxu0 %v556
    %1479 = vmatpush1.bf16.msra.mxu0 %v555
    %1480 = vmatprep.subr.bf16.mxu0 %v560
    %1481 = vmatpush1.bf16.msra.mxu0 %v559
    %1482 = vmatprep.subr.bf16.mxu0 %v564
    %1483 = vmatpush1.bf16.msra.mxu0 %v563
    %1484 = vmatprep.subr.bf16.mxu0 %v568
    %1485 = vmatpush1.bf16.msra.mxu0 %v567
    %1486 = vmatprep.subr.bf16.mxu0 %v572
    %1487 = vmatpush1.bf16.msra.mxu0 %v571
    %1488 = vmatprep.subr.bf16.mxu0 0
    %1489 = vmatpush1.bf16.msra.mxu0 0
    %1490 = vmatprep.subr.bf16.mxu0 0
    %1491 = vmatpush1.bf16.msra.mxu0 0
    %1492 = vmatprep.subr.bf16.mxu0 0
    %1493 = vmatpush1.bf16.msra.mxu0 0
    %1494 = vmatprep.subr.bf16.mxu0 0
    %1495 = vmatpush1.bf16.msra.mxu0 0
    %1496 = vmatprep.subr.bf16.mxu0 0
    %1497 = vmatpush1.bf16.msra.mxu0 0
    %1498 = vmatprep.subr.bf16.mxu0 0
    %1499 = vmatpush1.bf16.msra.mxu0 0
    %1500 = vmatprep.subr.bf16.mxu0 0
    %1501 = vmatpush1.bf16.msra.mxu0 0
    %1502 = vmatprep.subr.bf16.mxu0 0
    %1503 = vmatpush1.bf16.msra.mxu0 0
    %1504 = vmatprep.mubr.bf16.mxu0 0
    %1505 = vmatmul.mubr.bf16.gmra.mrb[0].mxu0 %v1430
    %v1506 = vpop.f32.mrb[0].mxu0
    %v1507 = vadd.f32 0.0, %v1506
    %v1508 = vpop.f32.mrb[0].mxu0
    %v1509 = vadd.f32 0.0, %v1508
    %v1510 = vpop.f32.mrb[0].mxu0
    %v1511 = vpop.f32.mrb[0].mxu0
    %1512 = vdwg.mxu0
    %v1513 = vadd.f32 %v1426, %v1466
    %v1514 = vadd.f32 %v1427, %v1468
    %v1515 = vadd.f32 %v1428, %v1507
    %v1516 = vadd.f32 %v1429, %v1509
    %v1517 = vxor.u32 %v1513, 2147483648
    %v1518 = vmul.f32 %v1517, 1.442695
    %v1519 = vpow.pop %v1518
    %v1520 = vadd.f32 %v1519, 1.0
    %v1521 = vrcp.pop %v1520
    %v1522 = vmul.f32 1.0, %v1521
    %v1523 = vxor.u32 %v1514, 2147483648
    %v1524 = vmul.f32 %v1523, 1.442695
    %v1525 = vpow.pop %v1524
    %v1526 = vadd.f32 %v1525, 1.0
    %v1527 = vrcp.pop %v1526
    %v1528 = vmul.f32 1.0, %v1527
    %v1529 = vtanh.pop %v1515
    %v1530 = vxor.u32 %v1516, 2147483648
    %v1531 = vmul.f32 %v1530, 1.442695
    %v1532 = vpow.pop %v1531
    %v1533 = vadd.f32 %v1532, 1.0
    %v1534 = vrcp.pop %v1533
    %v1535 = vmul.f32 1.0, %v1534
    %v1536 = vmul.f32 %v1528, %v1420
    %v1537 = vmul.f32 %v1522, %v1529
    %v1538 = vadd.f32 %v1536, %v1537
    %v1539 = vtanh.pop %v1538
    %v1540 = vmul.f32 %v1535, %v1539
    %v1541 = vld [vmem:[%s5] sm:$0xff]
    %v1542 = vld [vmem:[%s5 + $0x8] sm:$0xff]
    %v1543 = vld [vmem:[%s5 + $0x10] sm:$0xff]
    %v1544 = vld [vmem:[%s5 + $0x18] sm:$0xff]
    %v1545 = vld [vmem:[%s5 + $0x20] sm:$0xff]
    %v1546 = vld [vmem:[%s5 + $0x28] sm:$0xff]
    %v1547 = vld [vmem:[%s5 + $0x30] sm:$0xff]
    %v1548 = vld [vmem:[%s5 + $0x38] sm:$0xff]
    %v1549 = vld [vmem:[%s5 + $0x40] sm:$0xff]
    %v1550 = vld [vmem:[%s5 + $0x48] sm:$0xff]
    %v1551 = vld [vmem:[%s5 + $0x50] sm:$0xff]
    %v1552 = vld [vmem:[%s5 + $0x58] sm:$0xff]
    %v1553 = vld [vmem:[%s5 + $0x60] sm:$0xff]
    %v1554 = vld [vmem:[%s5 + $0x68] sm:$0xff]
    %v1555 = vld [vmem:[%s5 + $0x70] sm:$0xff]
    %v1556 = vld [vmem:[%s5 + $0x78] sm:$0xff]
    %v1557 = vld [vmem:[%s6] sm:$0x1]
    %v1559 = vlaneseq
    %v1560 = vshrl.u32 %v1559, 7
    %v1561 = vsub.s32 0, %v1560
    %v1562 = vrot.slane %v1557, %v1561
    %1564 = vmatprep.subr.mxu0 0.0
    %1565 = vmatpush1.msra.mxu0 %v1541
    %1566 = vmatprep.subr.mxu0 0.0
    %1567 = vmatpush1.msra.mxu0 %v1542
    %1568 = vmatprep.subr.mxu0 0.0
    %1569 = vmatpush1.msra.mxu0 %v1543
    %1570 = vmatprep.subr.mxu0 0.0
    %1571 = vmatpush1.msra.mxu0 %v1544
    %1572 = vmatprep.subr.mxu0 0.0
    %1573 = vmatpush1.msra.mxu0 %v1545
    %1574 = vmatprep.subr.mxu0 0.0
    %1575 = vmatpush1.msra.mxu0 %v1546
    %1576 = vmatprep.subr.mxu0 0.0
    %1577 = vmatpush1.msra.mxu0 %v1547
    %1578 = vmatprep.subr.mxu0 0.0
    %1579 = vmatpush1.msra.mxu0 %v1548
    %1580 = vmatprep.subr.mxu0 0.0
    %1581 = vmatpush1.msra.mxu0 %v1549
    %1582 = vmatprep.subr.mxu0 0.0
    %1583 = vmatpush1.msra.mxu0 %v1550
    %1584 = vmatprep.subr.mxu0 0.0
    %1585 = vmatpush1.msra.mxu0 %v1551
    %1586 = vmatprep.subr.mxu0 0.0
    %1587 = vmatpush1.msra.mxu0 %v1552
    %1588 = vmatprep.subr.mxu0 0.0
    %1589 = vmatpush1.msra.mxu0 %v1553
    %1590 = vmatprep.subr.mxu0 0.0
    %1591 = vmatpush1.msra.mxu0 %v1554
    %1592 = vmatprep.subr.mxu0 0.0
    %1593 = vmatpush1.msra.mxu0 %v1555
    %1594 = vmatprep.subr.mxu0 0.0
    %1595 = vmatpush1.msra.mxu0 %v1556
    %1596 = vmatprep.subr.mxu0 0.0
    %1597 = vmatpush1.msra.mxu0 0.0
    %1598 = vmatprep.subr.mxu0 0.0
    %1599 = vmatpush1.msra.mxu0 0.0
    %1600 = vmatprep.subr.mxu0 0.0
    %1601 = vmatpush1.msra.mxu0 0.0
    %1602 = vmatprep.subr.mxu0 0.0
    %1603 = vmatpush1.msra.mxu0 0.0
    %1604 = vmatprep.subr.mxu0 0.0
    %1605 = vmatpush1.msra.mxu0 0.0
    %1606 = vmatprep.subr.mxu0 0.0
    %1607 = vmatpush1.msra.mxu0 0.0
    %1608 = vmatprep.subr.mxu0 0.0
    %1609 = vmatpush1.msra.mxu0 0.0
    %1610 = vmatprep.subr.mxu0 0.0
    %1611 = vmatpush1.msra.mxu0 0.0
    %1612 = vmatprep.subr.mxu0 0.0
    %1613 = vmatpush1.msra.mxu0 0.0
    %1614 = vmatprep.subr.mxu0 0.0
    %1615 = vmatpush1.msra.mxu0 0.0
    %1616 = vmatprep.subr.mxu0 0.0
    %1617 = vmatpush1.msra.mxu0 0.0
    %1618 = vmatprep.subr.mxu0 0.0
    %1619 = vmatpush1.msra.mxu0 0.0
    %1620 = vmatprep.subr.mxu0 0.0
    %1621 = vmatpush1.msra.mxu0 0.0
    %1622 = vmatprep.subr.mxu0 0.0
    %1623 = vmatpush1.msra.mxu0 0.0
    %1624 = vmatprep.subr.mxu0 0.0
    %1625 = vmatpush1.msra.mxu0 0.0
    %1626 = vmatprep.subr.mxu0 0.0
    %1627 = vmatpush1.msra.mxu0 0.0
    %1628 = vmatprep.mubr.f32.mxu0 0.0
    %1629 = vmatmul.mubr.f32.gmra.mrb[0].mxu0 %v1540
    %v1630 = vpop.f32.mrb[0].mxu0
    %v1631 = vadd.f32 %v1562, %v1630
    %v1632 = vpop.f32.mrb[0].mxu0
    %1633 = vdwg.mxu0
    %1634 = vmax.xlane.f32.xlu0 %v1631
    %v1635 = vpop.xlane.xlu0 %1634
    %v1636 = vsub.f32 %v1631, %v1635
    %v1637 = vmul.f32 %v1636, 1.442695
    %v1638 = vpow.pop %v1637
    %1639 = vadd.xlane.f32.xlu0 %v1638
    %v1640 = vpop.xlane.xlu0 %1639
    %v1641 = vrcp.pop %v1640
    %v1642 = vmul.f32 %v1638, %v1641
    %1643 = vst [vmem:[#allocation11] sm:$0xff] %v1642
    // Predicated region
    $region34: #{tpu_custom_call.1} parent=1 // pred_check
      _
    $region35: #{tpu_custom_call.1} parent=1 // pred_check_branch
      %1645 = sbr.rel (0) target = $region37
    $region36: #{tpu_custom_call.1} parent=1 // pred_region
      %s1647 = ssub.s32 128, 128
      %1648 = vsyncadd [#allocation8], %s1647
      %s1650 = sshll.u32 [#allocation11], 4
      %s1651 = int_to_ptr.vmem [resolvable:$true] %s1650
      %1653 = dma.vmem_to_hbm [thread:$0]  %s1651, 128, %s7, [#allocation8]
    $region37: #{tpu_custom_call.1} parent=1 // pred_fallthru
      _
    // Predicated region
    $region38: #{tpu_custom_call.1} parent=1 // pred_check
      _
    $region39: #{tpu_custom_call.1} parent=1 // pred_check_branch
      %1655 = sbr.rel (0) target = $region41
    $region40: #{tpu_custom_call.1} parent=1 // pred_region
      %1656 = dma.done [#allocation8], 128
    $region41: #{tpu_custom_call.1} parent=1 // pred_fallthru
      _
    %1657 = vsyncpa [#allocation7], 1
    %1658 = vsyncpa [#allocation10], 1
    %1659 = vsyncpa [#allocation8], 1

</llo_original>
